<compile_context>
chip_gen: v7x
topology: tpu7x:2x2x1
jax: 0.10.0
libtpu: 0.0.40
codegen_flags: <defaults>
</compile_context>

<pallas_src>
import numpy as np
import jax
import jax.numpy as jnp
from jax.experimental import pallas as pl
from jax.experimental.pallas import tpu as pltpu


K = 7  # all convs are 7x7, stride 2, padding 3

# ---- layer 1 (ConvTranspose2d 16->2) polyphase geometry ---------------------
XP = 18                       # 14 + 2 + 2 zero-padded input side
XL = XP * XP                  # 324 flattened padded input length
ST = 18                       # flat row stride shared by the layer-1/2 maps
L1 = 13 * ST + 14             # 248 flat accumulator length (covers 14x14)
NS1 = 16                      # 16 deduped (row,col)-offset input slices
K1 = NS1 * 16                 # 256 layer-1 contraction size

# ---- layer 2 (Conv2d 2->16, s=2) polyphase geometry -------------------------
# The 4 parity planes of the 27x27 map ARE the 4 layer-1 phases.  Each plane is
# placed at lane offset D2[p] inside one shared buffer so a single slice start
# works for every (dh, dw) = (kh//2, kw//2) tap-offset group (8 rows at once).
D2 = (19, 20, 37, 38)         # = dr*18 + dc with (dr, dc) in {1,2}^2 per plane
LB2 = 312                     # >= max slice start (57) + L1
NS2 = 16                      # (dh, dw) groups
K2 = NS2 * 8                  # 128 layer-2 contraction size
L2 = L1                       # 248 layer-2 accumulator (14x14 @ stride 18)

# ---- layer 3 (Conv2d 16->12, s=2) polyphase geometry ------------------------
ST3 = 10                      # flat row stride of the padded 7x7 plane buffers
S3 = 104                      # per-plane buffer length (>= 33 + 70)
L3 = 7 * ST3                  # 70 layer-3 accumulator (7 rows x 10; col>=7 junk)
K3 = 49 * 16                  # 784 layer-3 contraction size


# -----------------------------------------------------------------------------
# Pallas kernel: whole 3-layer conv + SiLU pipeline for one batch element.
# -----------------------------------------------------------------------------
def _fused_conv3_silu_kernel(x_ref, w1_ref, b1_ref, m1_ref, w2_ref, b2_ref,
                             g3_ref, w3_ref, b3_ref, out_ref,
                             c1_ref, c2_ref, c3_ref):
    f32 = jnp.float32
    bf16 = jnp.bfloat16

    def silu(v):
        # exp / divide run on the EUP slot; values are bounded so no NaN risk.
        return v / (1.0 + jnp.exp(-v))

    # ---- layer 1: ConvTranspose2d(16->2) as 4 output-parity phases ----------
    # 16 deduped shifted views of the padded 18x18 input -> contraction rows.
    x = x_ref[0]                                               # (16, 324) bf16
    for ai in range(4):
        for bi in range(4):
            k = ai * 4 + bi
            s = (ai + 1) * ST + (bi + 1)
            c1_ref[16 * k:16 * (k + 1), :] = x[:, s:s + L1]
    acc1 = jnp.dot(w1_ref[...], c1_ref[...], preferred_element_type=f32)
    act1 = (silu(acc1 + b1_ref[...]) * m1_ref[...]).astype(bf16)   # (8, 248)

    # ---- place the 4 parity planes at their lane offsets (shared buffer) ----
    pieces = []
    for p in range(4):
        front = jnp.zeros((2, D2[p]), bf16)
        back = jnp.zeros((2, LB2 - D2[p] - L1), bf16)
        pieces.append(
            jnp.concatenate([front, act1[2 * p:2 * p + 2, :], back], axis=1))
    b_all = jnp.concatenate(pieces, axis=0)                        # (8, 312)

    # ---- layer 2: Conv2d(2->16, s=2): 16 (dh,dw) tap groups, one matmul -----
    for dh in range(4):
        for dw in range(4):
            k = dh * 4 + dw
            s = dh * ST + dw
            c2_ref[8 * k:8 * (k + 1), :] = b_all[:, s:s + L2]
    acc2 = jnp.dot(w2_ref[...], c2_ref[...], preferred_element_type=f32)
    z = silu(acc2 + b2_ref[...]).astype(bf16)                      # (16, 248)

    # ---- parity-split + re-pad the 14x14 map for layer 3 (exact 0/1 matmul) -
    planes3 = jnp.dot(z, g3_ref[...],
                      preferred_element_type=f32).astype(bf16)     # (16, 416)

    # ---- layer 3: Conv2d(16->12, s=2): 49 tap slices -> one matmul ----------
    for kh in range(K):
        for kw in range(K):
            t = kh * K + kw
            p = ((kh + 1) % 2) * 2 + ((kw + 1) % 2)
            s = p * S3 + (kh // 2) * ST3 + (kw // 2)
            c3_ref[16 * t:16 * (t + 1), :] = planes3[:, s:s + L3]
    acc3 = jnp.dot(w3_ref[...], c3_ref[...], preferred_element_type=f32)
    out_ref[0] = silu(acc3 + b3_ref[...])                          # (12, 70)


# -----------------------------------------------------------------------------
# Host-side one-time parameter / constant preparation.
# -----------------------------------------------------------------------------
def prepare_params(params):
    wt, bt = params["conv_transpose_2"]   # IOHW (16, 2, 7, 7), (2,)
    w2, b2 = params["conv_2"]             # OIHW (16, 2, 7, 7), (16,)
    w3, b3 = params["conv_3"]             # OIHW (12, 16, 7, 7), (12,)
    wt = np.asarray(wt, np.float32)
    w2 = np.asarray(w2, np.float32)
    w3 = np.asarray(w3, np.float32)

    # layer 1: rows = 4 phases x 2 out-ch, cols = 16 deduped slices x 16 in-ch
    w1g = np.zeros((8, K1), np.float32)
    for kh in range(K):
        for kw in range(K):
            p = ((kh + 1) % 2) * 2 + ((kw + 1) % 2)
            ai = (4 - kh) // 2 + 1        # row-offset slice index in [0, 4)
            bi = (4 - kw) // 2 + 1        # col-offset slice index in [0, 4)
            k = ai * 4 + bi
            w1g[2 * p:2 * p + 2, k * 16:(k + 1) * 16] = wt[:, :, kh, kw].T
    b1 = np.tile(np.asarray(bt, np.float32), 4).reshape(8, 1)

    # layer-1 phase validity mask (zeros the row-wrap / short-phase columns)
    m1 = np.zeros((8, L1), np.float32)
    j = np.arange(L1)
    for p in range(4):
        h, w = 14 - p // 2, 14 - p % 2
        valid = ((j // ST) < h) & ((j % ST) < w)
        m1[2 * p:2 * p + 2, :] = valid.astype(np.float32)

    # layer 2: cols = 16 (dh,dw) groups x (4 planes x 2 ch)
    w2g = np.zeros((16, K2), np.float32)
    for dh in range(4):
        for dw in range(4):
            base = (dh * 4 + dw) * 8
            for p in range(4):
                kh = 2 * dh + (1 - p // 2)
                kw = 2 * dw + (1 - p % 2)
                if kh >= K or kw >= K:
                    continue
                w2g[:, base + 2 * p:base + 2 * p + 2] = w2[:, :, kh, kw]
    b2v = np.asarray(b2, np.float32).reshape(16, 1)

    # exact 0/1 parity-split + re-pad selection feeding layer 3
    g3 = np.zeros((L2, 4 * S3), np.float32)
    for p in range(4):
        rho, gam = p // 2, p % 2
        dr, dc = (1 if rho == 0 else 2), (1 if gam == 0 else 2)
        for r in range(7):
            for c in range(7):
                src = (2 * r + rho) * ST + (2 * c + gam)
                dst = p * S3 + (r + dr) * ST3 + (c + dc)
                g3[src, dst] = 1.0

    # layer 3: cols = 49 taps x 16 ch (tap-major, same order as kernel stores)
    w3f = np.zeros((12, K3), np.float32)
    for kh in range(K):
        for kw in range(K):
            t = kh * K + kw
            w3f[:, t * 16:(t + 1) * 16] = w3[:, :, kh, kw]
    b3v = np.asarray(b3, np.float32).reshape(12, 1)

    bf = jnp.bfloat16
    return {
        "w1": jnp.asarray(w1g, bf), "b1": jnp.asarray(b1),
        "m1": jnp.asarray(m1),
        "w2": jnp.asarray(w2g, bf), "b2": jnp.asarray(b2v),
        "g3": jnp.asarray(g3, bf),
        "w3": jnp.asarray(w3f, bf), "b3": jnp.asarray(b3v),
    }


# -----------------------------------------------------------------------------
# Forward pass: one pallas_call over a batch grid (kept "parallel" for v7x).
# -----------------------------------------------------------------------------
def model_forward(x, prepped):
    """x: (N, 16, 14, 14) f32 -> (N, 12, 7, 7) f32."""
    n = x.shape[0]
    xp = jnp.pad(x, ((0, 0), (0, 0), (2, 2), (2, 2)))          # (N,16,18,18)
    a1 = xp.reshape(n, 16, XL).astype(jnp.bfloat16)

    out = pl.pallas_call(
        _fused_conv3_silu_kernel,
        out_shape=jax.ShapeDtypeStruct((n, 12, L3), jnp.float32),
        grid_spec=pltpu.PrefetchScalarGridSpec(
            num_scalar_prefetch=0,
            grid=(n,),
            in_specs=[
                pl.BlockSpec((1, 16, XL), lambda i: (i, 0, 0)),    # x
                pl.BlockSpec((8, K1), lambda i: (0, 0)),           # w1
                pl.BlockSpec((8, 1), lambda i: (0, 0)),            # b1
                pl.BlockSpec((8, L1), lambda i: (0, 0)),           # mask1
                pl.BlockSpec((16, K2), lambda i: (0, 0)),          # w2
                pl.BlockSpec((16, 1), lambda i: (0, 0)),           # b2
                pl.BlockSpec((L2, 4 * S3), lambda i: (0, 0)),      # g3
                pl.BlockSpec((12, K3), lambda i: (0, 0)),          # w3
                pl.BlockSpec((12, 1), lambda i: (0, 0)),           # b3
            ],
            out_specs=pl.BlockSpec((1, 12, L3), lambda i: (i, 0, 0)),
            scratch_shapes=[
                pltpu.VMEM((K1, L1), jnp.bfloat16),   # layer-1 im2col
                pltpu.VMEM((K2, L2), jnp.bfloat16),   # layer-2 im2col
                pltpu.VMEM((K3, L3), jnp.bfloat16),   # layer-3 im2col
            ],
        ),
        compiler_params=pltpu.CompilerParams(
            dimension_semantics=("parallel",)),
    )(a1, prepped["w1"], prepped["b1"], prepped["m1"], prepped["w2"],
      prepped["b2"], prepped["g3"], prepped["w3"], prepped["b3"])

    # drop the row-wrap garbage columns of the final 7x7 accumulator
    return out.reshape(n, 12, 7, ST3)[..., :7]


# -----------------------------------------------------------------------------
# Pure-JAX reference (f32) for validation.
# -----------------------------------------------------------------------------
def reference_forward(x, params):
    wt, bt = params["conv_transpose_2"]
    w2, b2 = params["conv_2"]
    w3, b3 = params["conv_3"]
    dn = ("NCHW", "OIHW", "NCHW")
    silu = lambda v: v * jax.nn.sigmoid(v)
    w1 = jnp.flip(wt, axis=(-2, -1)).transpose(1, 0, 2, 3)
    v = jax.lax.conv_general_dilated(x, w1, (1, 1), [(3, 3), (3, 3)],
                                     lhs_dilation=(2, 2), dimension_numbers=dn)
    v = silu(v + bt.reshape(1, -1, 1, 1))
    v = jax.lax.conv_general_dilated(v, w2, (2, 2), [(3, 3), (3, 3)],
                                     dimension_numbers=dn)
    v = silu(v + b2.reshape(1, -1, 1, 1))
    v = jax.lax.conv_general_dilated(v, w3, (2, 2), [(3, 3), (3, 3)],
                                     dimension_numbers=dn)
    v = silu(v + b3.reshape(1, -1, 1, 1))
    return v


# -----------------------------------------------------------------------------
# Deterministic parameter init (uniform +-1/sqrt(fan_in), PyTorch-style scale).
# -----------------------------------------------------------------------------
def init_params(key):
    def uniform(k, shape, fan_in):
        bound = 1.0 / (fan_in ** 0.5)
        return jax.random.uniform(k, shape, jnp.float32, -bound, bound)

    ks = jax.random.split(key, 6)
    return {
        # ConvTranspose2d(16, 2, 7, stride=2, padding=3): weight IOHW
        "conv_transpose_2": (uniform(ks[0], (16, 2, K, K), 16 * K * K),
                             uniform(ks[1], (2,), 16 * K * K)),
        # Conv2d(2, 16, 7, stride=2, padding=3): weight OIHW
        "conv_2": (uniform(ks[2], (16, 2, K, K), 2 * K * K),
                   uniform(ks[3], (16,), 2 * K * K)),
        # Conv2d(16, 12, 7, stride=2, padding=3): weight OIHW
        "conv_3": (uniform(ks[4], (12, 16, K, K), 16 * K * K),
                   uniform(ks[5], (12,), 16 * K * K)),
    }


if __name__ == "__main__":
    key = jax.random.PRNGKey(0)
    k_x, k_p = jax.random.split(key)

    params = init_params(k_p)
    prepped = prepare_params(params)

    # NCHW input with the 16 channels conv_transpose_2 expects; batch = 2.
    x = jax.random.normal(k_x, (2, 16, 14, 14), dtype=jnp.float32)

    fwd = jax.jit(model_forward)
    out = jax.block_until_ready(fwd(x, prepped))

    assert out.shape == (2, 12, 7, 7), out.shape
    assert bool(jnp.all(jnp.isfinite(out)))

    ref = jax.block_until_ready(reference_forward(x, params))
    max_err = float(jnp.max(jnp.abs(out - ref)))
    assert max_err < 2e-2, f"max abs error {max_err}"

    print("KERNEL_OK")
</pallas_src>

<mosaic_0001>
module attributes {stable_mosaic.version = 11 : i64} {
  func.func @_fused_conv3_silu_kernel(%arg0: i32, %arg1: memref<1x16x324xbf16, #tpu.memory_space<vmem>>, %arg2: memref<8x256xbf16, #tpu.memory_space<vmem>>, %arg3: memref<8x1xf32, #tpu.memory_space<vmem>>, %arg4: memref<8x248xf32, #tpu.memory_space<vmem>>, %arg5: memref<16x128xbf16, #tpu.memory_space<vmem>>, %arg6: memref<16x1xf32, #tpu.memory_space<vmem>>, %arg7: memref<248x416xbf16, #tpu.memory_space<vmem>>, %arg8: memref<12x784xbf16, #tpu.memory_space<vmem>>, %arg9: memref<12x1xf32, #tpu.memory_space<vmem>>, %arg10: memref<1x12x70xf32, #tpu.memory_space<vmem>>, %arg11: memref<256x248xbf16, #tpu.memory_space<vmem>>, %arg12: memref<128x248xbf16, #tpu.memory_space<vmem>>, %arg13: memref<784x70xbf16, #tpu.memory_space<vmem>>) attributes {dimension_semantics = [#tpu.dimension_semantics<parallel>], iteration_bounds = array<i64: 2>, scalar_prefetch = 0 : i64, scratch_operands = 3 : i64, tpu.core_type = #tpu.core_type<tc>, window_params = [{transform_indices = @transform_0, window_bounds = array<i64: 1, 16, 324>}, {pipeline_mode = #tpu.pipeline_mode<synchronous>, transform_indices = @transform_1, window_bounds = array<i64: 8, 256>}, {pipeline_mode = #tpu.pipeline_mode<synchronous>, transform_indices = @transform_2, window_bounds = array<i64: 8, 1>}, {pipeline_mode = #tpu.pipeline_mode<synchronous>, transform_indices = @transform_3, window_bounds = array<i64: 8, 248>}, {pipeline_mode = #tpu.pipeline_mode<synchronous>, transform_indices = @transform_4, window_bounds = array<i64: 16, 128>}, {pipeline_mode = #tpu.pipeline_mode<synchronous>, transform_indices = @transform_5, window_bounds = array<i64: 16, 1>}, {pipeline_mode = #tpu.pipeline_mode<synchronous>, transform_indices = @transform_6, window_bounds = array<i64: 248, 416>}, {pipeline_mode = #tpu.pipeline_mode<synchronous>, transform_indices = @transform_7, window_bounds = array<i64: 12, 784>}, {pipeline_mode = #tpu.pipeline_mode<synchronous>, transform_indices = @transform_8, window_bounds = array<i64: 12, 1>}, {transform_indices = @transform_9, window_bounds = array<i64: 1, 12, 70>}]} {
    %c0 = arith.constant 0 : index
    %c0_0 = arith.constant 0 : index
    %c0_1 = arith.constant 0 : index
    %0 = vector.load %arg1[%c0, %c0_0, %c0_1] : memref<1x16x324xbf16, #tpu.memory_space<vmem>>, vector<1x16x324xbf16>
    %1 = vector.shape_cast %0 : vector<1x16x324xbf16> to vector<16x324xbf16>
    %2 = vector.extract_strided_slice %1 {offsets = [0, 19], sizes = [16, 248], strides = [1, 1]} : vector<16x324xbf16> to vector<16x248xbf16>
    %c0_2 = arith.constant 0 : index
    %c0_3 = arith.constant 0 : index
    %3 = vector.load %arg11[%c0_2, %c0_3] : memref<256x248xbf16, #tpu.memory_space<vmem>>, vector<16x248xbf16>
    tpu.vector_store %arg11[%c0_2, %c0_3], %2 {strides = array<i32>} : memref<256x248xbf16, #tpu.memory_space<vmem>>, vector<16x248xbf16>,
    %4 = vector.extract_strided_slice %1 {offsets = [0, 20], sizes = [16, 248], strides = [1, 1]} : vector<16x324xbf16> to vector<16x248xbf16>
    %c16 = arith.constant 16 : index
    %c0_4 = arith.constant 0 : index
    %5 = vector.load %arg11[%c16, %c0_4] : memref<256x248xbf16, #tpu.memory_space<vmem>>, vector<16x248xbf16>
    tpu.vector_store %arg11[%c16, %c0_4], %4 {strides = array<i32>} : memref<256x248xbf16, #tpu.memory_space<vmem>>, vector<16x248xbf16>,
    %6 = vector.extract_strided_slice %1 {offsets = [0, 21], sizes = [16, 248], strides = [1, 1]} : vector<16x324xbf16> to vector<16x248xbf16>
    %c32 = arith.constant 32 : index
    %c0_5 = arith.constant 0 : index
    %7 = vector.load %arg11[%c32, %c0_5] : memref<256x248xbf16, #tpu.memory_space<vmem>>, vector<16x248xbf16>
    tpu.vector_store %arg11[%c32, %c0_5], %6 {strides = array<i32>} : memref<256x248xbf16, #tpu.memory_space<vmem>>, vector<16x248xbf16>,
    %8 = vector.extract_strided_slice %1 {offsets = [0, 22], sizes = [16, 248], strides = [1, 1]} : vector<16x324xbf16> to vector<16x248xbf16>
    %c48 = arith.constant 48 : index
    %c0_6 = arith.constant 0 : index
    %9 = vector.load %arg11[%c48, %c0_6] : memref<256x248xbf16, #tpu.memory_space<vmem>>, vector<16x248xbf16>
    tpu.vector_store %arg11[%c48, %c0_6], %8 {strides = array<i32>} : memref<256x248xbf16, #tpu.memory_space<vmem>>, vector<16x248xbf16>,
    %10 = vector.extract_strided_slice %1 {offsets = [0, 37], sizes = [16, 248], strides = [1, 1]} : vector<16x324xbf16> to vector<16x248xbf16>
    %c64 = arith.constant 64 : index
    %c0_7 = arith.constant 0 : index
    %11 = vector.load %arg11[%c64, %c0_7] : memref<256x248xbf16, #tpu.memory_space<vmem>>, vector<16x248xbf16>
    tpu.vector_store %arg11[%c64, %c0_7], %10 {strides = array<i32>} : memref<256x248xbf16, #tpu.memory_space<vmem>>, vector<16x248xbf16>,
    %12 = vector.extract_strided_slice %1 {offsets = [0, 38], sizes = [16, 248], strides = [1, 1]} : vector<16x324xbf16> to vector<16x248xbf16>
    %c80 = arith.constant 80 : index
    %c0_8 = arith.constant 0 : index
    %13 = vector.load %arg11[%c80, %c0_8] : memref<256x248xbf16, #tpu.memory_space<vmem>>, vector<16x248xbf16>
    tpu.vector_store %arg11[%c80, %c0_8], %12 {strides = array<i32>} : memref<256x248xbf16, #tpu.memory_space<vmem>>, vector<16x248xbf16>,
    %14 = vector.extract_strided_slice %1 {offsets = [0, 39], sizes = [16, 248], strides = [1, 1]} : vector<16x324xbf16> to vector<16x248xbf16>
    %c96 = arith.constant 96 : index
    %c0_9 = arith.constant 0 : index
    %15 = vector.load %arg11[%c96, %c0_9] : memref<256x248xbf16, #tpu.memory_space<vmem>>, vector<16x248xbf16>
    tpu.vector_store %arg11[%c96, %c0_9], %14 {strides = array<i32>} : memref<256x248xbf16, #tpu.memory_space<vmem>>, vector<16x248xbf16>,
    %16 = vector.extract_strided_slice %1 {offsets = [0, 40], sizes = [16, 248], strides = [1, 1]} : vector<16x324xbf16> to vector<16x248xbf16>
    %c112 = arith.constant 112 : index
    %c0_10 = arith.constant 0 : index
    %17 = vector.load %arg11[%c112, %c0_10] : memref<256x248xbf16, #tpu.memory_space<vmem>>, vector<16x248xbf16>
    tpu.vector_store %arg11[%c112, %c0_10], %16 {strides = array<i32>} : memref<256x248xbf16, #tpu.memory_space<vmem>>, vector<16x248xbf16>,
    %18 = vector.extract_strided_slice %1 {offsets = [0, 55], sizes = [16, 248], strides = [1, 1]} : vector<16x324xbf16> to vector<16x248xbf16>
    %c128 = arith.constant 128 : index
    %c0_11 = arith.constant 0 : index
    %19 = vector.load %arg11[%c128, %c0_11] : memref<256x248xbf16, #tpu.memory_space<vmem>>, vector<16x248xbf16>
    tpu.vector_store %arg11[%c128, %c0_11], %18 {strides = array<i32>} : memref<256x248xbf16, #tpu.memory_space<vmem>>, vector<16x248xbf16>,
    %20 = vector.extract_strided_slice %1 {offsets = [0, 56], sizes = [16, 248], strides = [1, 1]} : vector<16x324xbf16> to vector<16x248xbf16>
    %c144 = arith.constant 144 : index
    %c0_12 = arith.constant 0 : index
    %21 = vector.load %arg11[%c144, %c0_12] : memref<256x248xbf16, #tpu.memory_space<vmem>>, vector<16x248xbf16>
    tpu.vector_store %arg11[%c144, %c0_12], %20 {strides = array<i32>} : memref<256x248xbf16, #tpu.memory_space<vmem>>, vector<16x248xbf16>,
    %22 = vector.extract_strided_slice %1 {offsets = [0, 57], sizes = [16, 248], strides = [1, 1]} : vector<16x324xbf16> to vector<16x248xbf16>
    %c160 = arith.constant 160 : index
    %c0_13 = arith.constant 0 : index
    %23 = vector.load %arg11[%c160, %c0_13] : memref<256x248xbf16, #tpu.memory_space<vmem>>, vector<16x248xbf16>
    tpu.vector_store %arg11[%c160, %c0_13], %22 {strides = array<i32>} : memref<256x248xbf16, #tpu.memory_space<vmem>>, vector<16x248xbf16>,
    %24 = vector.extract_strided_slice %1 {offsets = [0, 58], sizes = [16, 248], strides = [1, 1]} : vector<16x324xbf16> to vector<16x248xbf16>
    %c176 = arith.constant 176 : index
    %c0_14 = arith.constant 0 : index
    %25 = vector.load %arg11[%c176, %c0_14] : memref<256x248xbf16, #tpu.memory_space<vmem>>, vector<16x248xbf16>
    tpu.vector_store %arg11[%c176, %c0_14], %24 {strides = array<i32>} : memref<256x248xbf16, #tpu.memory_space<vmem>>, vector<16x248xbf16>,
    %26 = vector.extract_strided_slice %1 {offsets = [0, 73], sizes = [16, 248], strides = [1, 1]} : vector<16x324xbf16> to vector<16x248xbf16>
    %c192 = arith.constant 192 : index
    %c0_15 = arith.constant 0 : index
    %27 = vector.load %arg11[%c192, %c0_15] : memref<256x248xbf16, #tpu.memory_space<vmem>>, vector<16x248xbf16>
    tpu.vector_store %arg11[%c192, %c0_15], %26 {strides = array<i32>} : memref<256x248xbf16, #tpu.memory_space<vmem>>, vector<16x248xbf16>,
    %28 = vector.extract_strided_slice %1 {offsets = [0, 74], sizes = [16, 248], strides = [1, 1]} : vector<16x324xbf16> to vector<16x248xbf16>
    %c208 = arith.constant 208 : index
    %c0_16 = arith.constant 0 : index
    %29 = vector.load %arg11[%c208, %c0_16] : memref<256x248xbf16, #tpu.memory_space<vmem>>, vector<16x248xbf16>
    tpu.vector_store %arg11[%c208, %c0_16], %28 {strides = array<i32>} : memref<256x248xbf16, #tpu.memory_space<vmem>>, vector<16x248xbf16>,
    %30 = vector.extract_strided_slice %1 {offsets = [0, 75], sizes = [16, 248], strides = [1, 1]} : vector<16x324xbf16> to vector<16x248xbf16>
    %c224 = arith.constant 224 : index
    %c0_17 = arith.constant 0 : index
    %31 = vector.load %arg11[%c224, %c0_17] : memref<256x248xbf16, #tpu.memory_space<vmem>>, vector<16x248xbf16>
    tpu.vector_store %arg11[%c224, %c0_17], %30 {strides = array<i32>} : memref<256x248xbf16, #tpu.memory_space<vmem>>, vector<16x248xbf16>,
    %32 = vector.extract_strided_slice %1 {offsets = [0, 76], sizes = [16, 248], strides = [1, 1]} : vector<16x324xbf16> to vector<16x248xbf16>
    %c240 = arith.constant 240 : index
    %c0_18 = arith.constant 0 : index
    %33 = vector.load %arg11[%c240, %c0_18] : memref<256x248xbf16, #tpu.memory_space<vmem>>, vector<16x248xbf16>
    tpu.vector_store %arg11[%c240, %c0_18], %32 {strides = array<i32>} : memref<256x248xbf16, #tpu.memory_space<vmem>>, vector<16x248xbf16>,
    %c0_19 = arith.constant 0 : index
    %c0_20 = arith.constant 0 : index
    %34 = vector.load %arg2[%c0_19, %c0_20] : memref<8x256xbf16, #tpu.memory_space<vmem>>, vector<8x256xbf16>
    %c0_21 = arith.constant 0 : index
    %c0_22 = arith.constant 0 : index
    %35 = vector.load %arg11[%c0_21, %c0_22] : memref<256x248xbf16, #tpu.memory_space<vmem>>, vector<256x248xbf16>
    %cst = arith.constant dense<0.000000e+00> : vector<8x248xf32>
    %36 = tpu.matmul %34, %35, %cst {dimension_numbers = #tpu.dot_dimension_numbers<[1], [0], [0], [1], [0, 0, 1, 1], [], []>} : vector<8x256xbf16>, vector<256x248xbf16>, vector<8x248xf32> -> vector<8x248xf32>
    %c0_23 = arith.constant 0 : index
    %c0_24 = arith.constant 0 : index
    %37 = vector.load %arg3[%c0_23, %c0_24] : memref<8x1xf32, #tpu.memory_space<vmem>>, vector<8x1xf32>
    %38 = vector.broadcast %37 : vector<8x1xf32> to vector<8x248xf32>
    %39 = arith.addf %36, %38 : vector<8x248xf32>
    %cst_25 = arith.constant 0.000000e+00 : f32
    %40 = vector.broadcast %cst_25 : f32 to vector<8x248xf32>
    %41 = arith.subf %40, %39 : vector<8x248xf32>
    %42 = math.exp %41 : vector<8x248xf32>
    %cst_26 = arith.constant 1.000000e+00 : f32
    %43 = vector.broadcast %cst_26 : f32 to vector<8x248xf32>
    %44 = arith.addf %43, %42 : vector<8x248xf32>
    %45 = arith.divf %39, %44 : vector<8x248xf32>
    %c0_27 = arith.constant 0 : index
    %c0_28 = arith.constant 0 : index
    %46 = vector.load %arg4[%c0_27, %c0_28] : memref<8x248xf32, #tpu.memory_space<vmem>>, vector<8x248xf32>
    %47 = arith.mulf %45, %46 : vector<8x248xf32>
    %48 = arith.truncf %47 : vector<8x248xf32> to vector<8x248xbf16>
    %cst_29 = arith.constant 0.000000e+00 : bf16
    %49 = vector.broadcast %cst_29 : bf16 to vector<2x19xbf16>
    %cst_30 = arith.constant 0.000000e+00 : bf16
    %50 = vector.broadcast %cst_30 : bf16 to vector<2x45xbf16>
    %51 = vector.extract_strided_slice %48 {offsets = [0, 0], sizes = [2, 248], strides = [1, 1]} : vector<8x248xbf16> to vector<2x248xbf16>
    %52 = tpu.concatenate %49, %51, %50 in 1 : vector<2x19xbf16>, vector<2x248xbf16>, vector<2x45xbf16> -> vector<2x312xbf16>
    %cst_31 = arith.constant 0.000000e+00 : bf16
    %53 = vector.broadcast %cst_31 : bf16 to vector<2x20xbf16>
    %cst_32 = arith.constant 0.000000e+00 : bf16
    %54 = vector.broadcast %cst_32 : bf16 to vector<2x44xbf16>
    %55 = vector.extract_strided_slice %48 {offsets = [2, 0], sizes = [2, 248], strides = [1, 1]} : vector<8x248xbf16> to vector<2x248xbf16>
    %56 = tpu.concatenate %53, %55, %54 in 1 : vector<2x20xbf16>, vector<2x248xbf16>, vector<2x44xbf16> -> vector<2x312xbf16>
    %cst_33 = arith.constant 0.000000e+00 : bf16
    %57 = vector.broadcast %cst_33 : bf16 to vector<2x37xbf16>
    %cst_34 = arith.constant 0.000000e+00 : bf16
    %58 = vector.broadcast %cst_34 : bf16 to vector<2x27xbf16>
    %59 = vector.extract_strided_slice %48 {offsets = [4, 0], sizes = [2, 248], strides = [1, 1]} : vector<8x248xbf16> to vector<2x248xbf16>
    %60 = tpu.concatenate %57, %59, %58 in 1 : vector<2x37xbf16>, vector<2x248xbf16>, vector<2x27xbf16> -> vector<2x312xbf16>
    %cst_35 = arith.constant 0.000000e+00 : bf16
    %61 = vector.broadcast %cst_35 : bf16 to vector<2x38xbf16>
    %cst_36 = arith.constant 0.000000e+00 : bf16
    %62 = vector.broadcast %cst_36 : bf16 to vector<2x26xbf16>
    %63 = vector.extract_strided_slice %48 {offsets = [6, 0], sizes = [2, 248], strides = [1, 1]} : vector<8x248xbf16> to vector<2x248xbf16>
    %64 = tpu.concatenate %61, %63, %62 in 1 : vector<2x38xbf16>, vector<2x248xbf16>, vector<2x26xbf16> -> vector<2x312xbf16>
    %65 = tpu.concatenate %52, %56, %60, %64 in 0 : vector<2x312xbf16>, vector<2x312xbf16>, vector<2x312xbf16>, vector<2x312xbf16> -> vector<8x312xbf16>
    %66 = vector.extract_strided_slice %65 {offsets = [0, 0], sizes = [8, 248], strides = [1, 1]} : vector<8x312xbf16> to vector<8x248xbf16>
    %c0_37 = arith.constant 0 : index
    %c0_38 = arith.constant 0 : index
    %67 = vector.load %arg12[%c0_37, %c0_38] : memref<128x248xbf16, #tpu.memory_space<vmem>>, vector<8x248xbf16>
    tpu.vector_store %arg12[%c0_37, %c0_38], %66 {strides = array<i32>} : memref<128x248xbf16, #tpu.memory_space<vmem>>, vector<8x248xbf16>,
    %68 = vector.extract_strided_slice %65 {offsets = [0, 1], sizes = [8, 248], strides = [1, 1]} : vector<8x312xbf16> to vector<8x248xbf16>
    %c8 = arith.constant 8 : index
    %c0_39 = arith.constant 0 : index
    %69 = vector.load %arg12[%c8, %c0_39] : memref<128x248xbf16, #tpu.memory_space<vmem>>, vector<8x248xbf16>
    tpu.vector_store %arg12[%c8, %c0_39], %68 {strides = array<i32>} : memref<128x248xbf16, #tpu.memory_space<vmem>>, vector<8x248xbf16>,
    %70 = vector.extract_strided_slice %65 {offsets = [0, 2], sizes = [8, 248], strides = [1, 1]} : vector<8x312xbf16> to vector<8x248xbf16>
    %c16_40 = arith.constant 16 : index
    %c0_41 = arith.constant 0 : index
    %71 = vector.load %arg12[%c16_40, %c0_41] : memref<128x248xbf16, #tpu.memory_space<vmem>>, vector<8x248xbf16>
    tpu.vector_store %arg12[%c16_40, %c0_41], %70 {strides = array<i32>} : memref<128x248xbf16, #tpu.memory_space<vmem>>, vector<8x248xbf16>,
    %72 = vector.extract_strided_slice %65 {offsets = [0, 3], sizes = [8, 248], strides = [1, 1]} : vector<8x312xbf16> to vector<8x248xbf16>
    %c24 = arith.constant 24 : index
    %c0_42 = arith.constant 0 : index
    %73 = vector.load %arg12[%c24, %c0_42] : memref<128x248xbf16, #tpu.memory_space<vmem>>, vector<8x248xbf16>
    tpu.vector_store %arg12[%c24, %c0_42], %72 {strides = array<i32>} : memref<128x248xbf16, #tpu.memory_space<vmem>>, vector<8x248xbf16>,
    %74 = vector.extract_strided_slice %65 {offsets = [0, 18], sizes = [8, 248], strides = [1, 1]} : vector<8x312xbf16> to vector<8x248xbf16>
    %c32_43 = arith.constant 32 : index
    %c0_44 = arith.constant 0 : index
    %75 = vector.load %arg12[%c32_43, %c0_44] : memref<128x248xbf16, #tpu.memory_space<vmem>>, vector<8x248xbf16>
    tpu.vector_store %arg12[%c32_43, %c0_44], %74 {strides = array<i32>} : memref<128x248xbf16, #tpu.memory_space<vmem>>, vector<8x248xbf16>,
    %76 = vector.extract_strided_slice %65 {offsets = [0, 19], sizes = [8, 248], strides = [1, 1]} : vector<8x312xbf16> to vector<8x248xbf16>
    %c40 = arith.constant 40 : index
    %c0_45 = arith.constant 0 : index
    %77 = vector.load %arg12[%c40, %c0_45] : memref<128x248xbf16, #tpu.memory_space<vmem>>, vector<8x248xbf16>
    tpu.vector_store %arg12[%c40, %c0_45], %76 {strides = array<i32>} : memref<128x248xbf16, #tpu.memory_space<vmem>>, vector<8x248xbf16>,
    %78 = vector.extract_strided_slice %65 {offsets = [0, 20], sizes = [8, 248], strides = [1, 1]} : vector<8x312xbf16> to vector<8x248xbf16>
    %c48_46 = arith.constant 48 : index
    %c0_47 = arith.constant 0 : index
    %79 = vector.load %arg12[%c48_46, %c0_47] : memref<128x248xbf16, #tpu.memory_space<vmem>>, vector<8x248xbf16>
    tpu.vector_store %arg12[%c48_46, %c0_47], %78 {strides = array<i32>} : memref<128x248xbf16, #tpu.memory_space<vmem>>, vector<8x248xbf16>,
    %80 = vector.extract_strided_slice %65 {offsets = [0, 21], sizes = [8, 248], strides = [1, 1]} : vector<8x312xbf16> to vector<8x248xbf16>
    %c56 = arith.constant 56 : index
    %c0_48 = arith.constant 0 : index
    %81 = vector.load %arg12[%c56, %c0_48] : memref<128x248xbf16, #tpu.memory_space<vmem>>, vector<8x248xbf16>
    tpu.vector_store %arg12[%c56, %c0_48], %80 {strides = array<i32>} : memref<128x248xbf16, #tpu.memory_space<vmem>>, vector<8x248xbf16>,
    %82 = vector.extract_strided_slice %65 {offsets = [0, 36], sizes = [8, 248], strides = [1, 1]} : vector<8x312xbf16> to vector<8x248xbf16>
    %c64_49 = arith.constant 64 : index
    %c0_50 = arith.constant 0 : index
    %83 = vector.load %arg12[%c64_49, %c0_50] : memref<128x248xbf16, #tpu.memory_space<vmem>>, vector<8x248xbf16>
    tpu.vector_store %arg12[%c64_49, %c0_50], %82 {strides = array<i32>} : memref<128x248xbf16, #tpu.memory_space<vmem>>, vector<8x248xbf16>,
    %84 = vector.extract_strided_slice %65 {offsets = [0, 37], sizes = [8, 248], strides = [1, 1]} : vector<8x312xbf16> to vector<8x248xbf16>
    %c72 = arith.constant 72 : index
    %c0_51 = arith.constant 0 : index
    %85 = vector.load %arg12[%c72, %c0_51] : memref<128x248xbf16, #tpu.memory_space<vmem>>, vector<8x248xbf16>
    tpu.vector_store %arg12[%c72, %c0_51], %84 {strides = array<i32>} : memref<128x248xbf16, #tpu.memory_space<vmem>>, vector<8x248xbf16>,
    %86 = vector.extract_strided_slice %65 {offsets = [0, 38], sizes = [8, 248], strides = [1, 1]} : vector<8x312xbf16> to vector<8x248xbf16>
    %c80_52 = arith.constant 80 : index
    %c0_53 = arith.constant 0 : index
    %87 = vector.load %arg12[%c80_52, %c0_53] : memref<128x248xbf16, #tpu.memory_space<vmem>>, vector<8x248xbf16>
    tpu.vector_store %arg12[%c80_52, %c0_53], %86 {strides = array<i32>} : memref<128x248xbf16, #tpu.memory_space<vmem>>, vector<8x248xbf16>,
    %88 = vector.extract_strided_slice %65 {offsets = [0, 39], sizes = [8, 248], strides = [1, 1]} : vector<8x312xbf16> to vector<8x248xbf16>
    %c88 = arith.constant 88 : index
    %c0_54 = arith.constant 0 : index
    %89 = vector.load %arg12[%c88, %c0_54] : memref<128x248xbf16, #tpu.memory_space<vmem>>, vector<8x248xbf16>
    tpu.vector_store %arg12[%c88, %c0_54], %88 {strides = array<i32>} : memref<128x248xbf16, #tpu.memory_space<vmem>>, vector<8x248xbf16>,
    %90 = vector.extract_strided_slice %65 {offsets = [0, 54], sizes = [8, 248], strides = [1, 1]} : vector<8x312xbf16> to vector<8x248xbf16>
    %c96_55 = arith.constant 96 : index
    %c0_56 = arith.constant 0 : index
    %91 = vector.load %arg12[%c96_55, %c0_56] : memref<128x248xbf16, #tpu.memory_space<vmem>>, vector<8x248xbf16>
    tpu.vector_store %arg12[%c96_55, %c0_56], %90 {strides = array<i32>} : memref<128x248xbf16, #tpu.memory_space<vmem>>, vector<8x248xbf16>,
    %92 = vector.extract_strided_slice %65 {offsets = [0, 55], sizes = [8, 248], strides = [1, 1]} : vector<8x312xbf16> to vector<8x248xbf16>
    %c104 = arith.constant 104 : index
    %c0_57 = arith.constant 0 : index
    %93 = vector.load %arg12[%c104, %c0_57] : memref<128x248xbf16, #tpu.memory_space<vmem>>, vector<8x248xbf16>
    tpu.vector_store %arg12[%c104, %c0_57], %92 {strides = array<i32>} : memref<128x248xbf16, #tpu.memory_space<vmem>>, vector<8x248xbf16>,
    %94 = vector.extract_strided_slice %65 {offsets = [0, 56], sizes = [8, 248], strides = [1, 1]} : vector<8x312xbf16> to vector<8x248xbf16>
    %c112_58 = arith.constant 112 : index
    %c0_59 = arith.constant 0 : index
    %95 = vector.load %arg12[%c112_58, %c0_59] : memref<128x248xbf16, #tpu.memory_space<vmem>>, vector<8x248xbf16>
    tpu.vector_store %arg12[%c112_58, %c0_59], %94 {strides = array<i32>} : memref<128x248xbf16, #tpu.memory_space<vmem>>, vector<8x248xbf16>,
    %96 = vector.extract_strided_slice %65 {offsets = [0, 57], sizes = [8, 248], strides = [1, 1]} : vector<8x312xbf16> to vector<8x248xbf16>
    %c120 = arith.constant 120 : index
    %c0_60 = arith.constant 0 : index
    %97 = vector.load %arg12[%c120, %c0_60] : memref<128x248xbf16, #tpu.memory_space<vmem>>, vector<8x248xbf16>
    tpu.vector_store %arg12[%c120, %c0_60], %96 {strides = array<i32>} : memref<128x248xbf16, #tpu.memory_space<vmem>>, vector<8x248xbf16>,
    %c0_61 = arith.constant 0 : index
    %c0_62 = arith.constant 0 : index
    %98 = vector.load %arg5[%c0_61, %c0_62] : memref<16x128xbf16, #tpu.memory_space<vmem>>, vector<16x128xbf16>
    %c0_63 = arith.constant 0 : index
    %c0_64 = arith.constant 0 : index
    %99 = vector.load %arg12[%c0_63, %c0_64] : memref<128x248xbf16, #tpu.memory_space<vmem>>, vector<128x248xbf16>
    %cst_65 = arith.constant dense<0.000000e+00> : vector<16x248xf32>
    %100 = tpu.matmul %98, %99, %cst_65 {dimension_numbers = #tpu.dot_dimension_numbers<[1], [0], [0], [1], [0, 0, 1, 1], [], []>} : vector<16x128xbf16>, vector<128x248xbf16>, vector<16x248xf32> -> vector<16x248xf32>
    %c0_66 = arith.constant 0 : index
    %c0_67 = arith.constant 0 : index
    %101 = vector.load %arg6[%c0_66, %c0_67] : memref<16x1xf32, #tpu.memory_space<vmem>>, vector<16x1xf32>
    %102 = vector.broadcast %101 : vector<16x1xf32> to vector<16x248xf32>
    %103 = arith.addf %100, %102 : vector<16x248xf32>
    %cst_68 = arith.constant 0.000000e+00 : f32
    %104 = vector.broadcast %cst_68 : f32 to vector<16x248xf32>
    %105 = arith.subf %104, %103 : vector<16x248xf32>
    %106 = math.exp %105 : vector<16x248xf32>
    %cst_69 = arith.constant 1.000000e+00 : f32
    %107 = vector.broadcast %cst_69 : f32 to vector<16x248xf32>
    %108 = arith.addf %107, %106 : vector<16x248xf32>
    %109 = arith.divf %103, %108 : vector<16x248xf32>
    %110 = arith.truncf %109 : vector<16x248xf32> to vector<16x248xbf16>
    %c0_70 = arith.constant 0 : index
    %c0_71 = arith.constant 0 : index
    %111 = vector.load %arg7[%c0_70, %c0_71] : memref<248x416xbf16, #tpu.memory_space<vmem>>, vector<248x416xbf16>
    %cst_72 = arith.constant dense<0.000000e+00> : vector<16x416xf32>
    %112 = tpu.matmul %110, %111, %cst_72 {dimension_numbers = #tpu.dot_dimension_numbers<[1], [0], [0], [1], [0, 0, 1, 1], [], []>} : vector<16x248xbf16>, vector<248x416xbf16>, vector<16x416xf32> -> vector<16x416xf32>
    %113 = arith.truncf %112 : vector<16x416xf32> to vector<16x416xbf16>
    %114 = vector.extract_strided_slice %113 {offsets = [0, 312], sizes = [16, 70], strides = [1, 1]} : vector<16x416xbf16> to vector<16x70xbf16>
    %c0_73 = arith.constant 0 : index
    %c0_74 = arith.constant 0 : index
    %115 = vector.load %arg13[%c0_73, %c0_74] : memref<784x70xbf16, #tpu.memory_space<vmem>>, vector<16x70xbf16>
    tpu.vector_store %arg13[%c0_73, %c0_74], %114 {strides = array<i32>} : memref<784x70xbf16, #tpu.memory_space<vmem>>, vector<16x70xbf16>,
    %116 = vector.extract_strided_slice %113 {offsets = [0, 208], sizes = [16, 70], strides = [1, 1]} : vector<16x416xbf16> to vector<16x70xbf16>
    %c16_75 = arith.constant 16 : index
    %c0_76 = arith.constant 0 : index
    %117 = vector.load %arg13[%c16_75, %c0_76] : memref<784x70xbf16, #tpu.memory_space<vmem>>, vector<16x70xbf16>
    tpu.vector_store %arg13[%c16_75, %c0_76], %116 {strides = array<i32>} : memref<784x70xbf16, #tpu.memory_space<vmem>>, vector<16x70xbf16>,
    %118 = vector.extract_strided_slice %113 {offsets = [0, 313], sizes = [16, 70], strides = [1, 1]} : vector<16x416xbf16> to vector<16x70xbf16>
    %c32_77 = arith.constant 32 : index
    %c0_78 = arith.constant 0 : index
    %119 = vector.load %arg13[%c32_77, %c0_78] : memref<784x70xbf16, #tpu.memory_space<vmem>>, vector<16x70xbf16>
    tpu.vector_store %arg13[%c32_77, %c0_78], %118 {strides = array<i32>} : memref<784x70xbf16, #tpu.memory_space<vmem>>, vector<16x70xbf16>,
    %120 = vector.extract_strided_slice %113 {offsets = [0, 209], sizes = [16, 70], strides = [1, 1]} : vector<16x416xbf16> to vector<16x70xbf16>
    %c48_79 = arith.constant 48 : index
    %c0_80 = arith.constant 0 : index
    %121 = vector.load %arg13[%c48_79, %c0_80] : memref<784x70xbf16, #tpu.memory_space<vmem>>, vector<16x70xbf16>
    tpu.vector_store %arg13[%c48_79, %c0_80], %120 {strides = array<i32>} : memref<784x70xbf16, #tpu.memory_space<vmem>>, vector<16x70xbf16>,
    %122 = vector.extract_strided_slice %113 {offsets = [0, 314], sizes = [16, 70], strides = [1, 1]} : vector<16x416xbf16> to vector<16x70xbf16>
    %c64_81 = arith.constant 64 : index
    %c0_82 = arith.constant 0 : index
    %123 = vector.load %arg13[%c64_81, %c0_82] : memref<784x70xbf16, #tpu.memory_space<vmem>>, vector<16x70xbf16>
    tpu.vector_store %arg13[%c64_81, %c0_82], %122 {strides = array<i32>} : memref<784x70xbf16, #tpu.memory_space<vmem>>, vector<16x70xbf16>,
    %124 = vector.extract_strided_slice %113 {offsets = [0, 210], sizes = [16, 70], strides = [1, 1]} : vector<16x416xbf16> to vector<16x70xbf16>
    %c80_83 = arith.constant 80 : index
    %c0_84 = arith.constant 0 : index
    %125 = vector.load %arg13[%c80_83, %c0_84] : memref<784x70xbf16, #tpu.memory_space<vmem>>, vector<16x70xbf16>
    tpu.vector_store %arg13[%c80_83, %c0_84], %124 {strides = array<i32>} : memref<784x70xbf16, #tpu.memory_space<vmem>>, vector<16x70xbf16>,
    %126 = vector.extract_strided_slice %113 {offsets = [0, 315], sizes = [16, 70], strides = [1, 1]} : vector<16x416xbf16> to vector<16x70xbf16>
    %c96_85 = arith.constant 96 : index
    %c0_86 = arith.constant 0 : index
    %127 = vector.load %arg13[%c96_85, %c0_86] : memref<784x70xbf16, #tpu.memory_space<vmem>>, vector<16x70xbf16>
    tpu.vector_store %arg13[%c96_85, %c0_86], %126 {strides = array<i32>} : memref<784x70xbf16, #tpu.memory_space<vmem>>, vector<16x70xbf16>,
    %128 = vector.extract_strided_slice %113 {offsets = [0, 104], sizes = [16, 70], strides = [1, 1]} : vector<16x416xbf16> to vector<16x70xbf16>
    %c112_87 = arith.constant 112 : index
    %c0_88 = arith.constant 0 : index
    %129 = vector.load %arg13[%c112_87, %c0_88] : memref<784x70xbf16, #tpu.memory_space<vmem>>, vector<16x70xbf16>
    tpu.vector_store %arg13[%c112_87, %c0_88], %128 {strides = array<i32>} : memref<784x70xbf16, #tpu.memory_space<vmem>>, vector<16x70xbf16>,
    %130 = vector.extract_strided_slice %113 {offsets = [0, 0], sizes = [16, 70], strides = [1, 1]} : vector<16x416xbf16> to vector<16x70xbf16>
    %c128_89 = arith.constant 128 : index
    %c0_90 = arith.constant 0 : index
    %131 = vector.load %arg13[%c128_89, %c0_90] : memref<784x70xbf16, #tpu.memory_space<vmem>>, vector<16x70xbf16>
    tpu.vector_store %arg13[%c128_89, %c0_90], %130 {strides = array<i32>} : memref<784x70xbf16, #tpu.memory_space<vmem>>, vector<16x70xbf16>,
    %132 = vector.extract_strided_slice %113 {offsets = [0, 105], sizes = [16, 70], strides = [1, 1]} : vector<16x416xbf16> to vector<16x70xbf16>
    %c144_91 = arith.constant 144 : index
    %c0_92 = arith.constant 0 : index
    %133 = vector.load %arg13[%c144_91, %c0_92] : memref<784x70xbf16, #tpu.memory_space<vmem>>, vector<16x70xbf16>
    tpu.vector_store %arg13[%c144_91, %c0_92], %132 {strides = array<i32>} : memref<784x70xbf16, #tpu.memory_space<vmem>>, vector<16x70xbf16>,
    %134 = vector.extract_strided_slice %113 {offsets = [0, 1], sizes = [16, 70], strides = [1, 1]} : vector<16x416xbf16> to vector<16x70xbf16>
    %c160_93 = arith.constant 160 : index
    %c0_94 = arith.constant 0 : index
    %135 = vector.load %arg13[%c160_93, %c0_94] : memref<784x70xbf16, #tpu.memory_space<vmem>>, vector<16x70xbf16>
    tpu.vector_store %arg13[%c160_93, %c0_94], %134 {strides = array<i32>} : memref<784x70xbf16, #tpu.memory_space<vmem>>, vector<16x70xbf16>,
    %136 = vector.extract_strided_slice %113 {offsets = [0, 106], sizes = [16, 70], strides = [1, 1]} : vector<16x416xbf16> to vector<16x70xbf16>
    %c176_95 = arith.constant 176 : index
    %c0_96 = arith.constant 0 : index
    %137 = vector.load %arg13[%c176_95, %c0_96] : memref<784x70xbf16, #tpu.memory_space<vmem>>, vector<16x70xbf16>
    tpu.vector_store %arg13[%c176_95, %c0_96], %136 {strides = array<i32>} : memref<784x70xbf16, #tpu.memory_space<vmem>>, vector<16x70xbf16>,
    %138 = vector.extract_strided_slice %113 {offsets = [0, 2], sizes = [16, 70], strides = [1, 1]} : vector<16x416xbf16> to vector<16x70xbf16>
    %c192_97 = arith.constant 192 : index
    %c0_98 = arith.constant 0 : index
    %139 = vector.load %arg13[%c192_97, %c0_98] : memref<784x70xbf16, #tpu.memory_space<vmem>>, vector<16x70xbf16>
    tpu.vector_store %arg13[%c192_97, %c0_98], %138 {strides = array<i32>} : memref<784x70xbf16, #tpu.memory_space<vmem>>, vector<16x70xbf16>,
    %140 = vector.extract_strided_slice %113 {offsets = [0, 107], sizes = [16, 70], strides = [1, 1]} : vector<16x416xbf16> to vector<16x70xbf16>
    %c208_99 = arith.constant 208 : index
    %c0_100 = arith.constant 0 : index
    %141 = vector.load %arg13[%c208_99, %c0_100] : memref<784x70xbf16, #tpu.memory_space<vmem>>, vector<16x70xbf16>
    tpu.vector_store %arg13[%c208_99, %c0_100], %140 {strides = array<i32>} : memref<784x70xbf16, #tpu.memory_space<vmem>>, vector<16x70xbf16>,
    %142 = vector.extract_strided_slice %113 {offsets = [0, 322], sizes = [16, 70], strides = [1, 1]} : vector<16x416xbf16> to vector<16x70xbf16>
    %c224_101 = arith.constant 224 : index
    %c0_102 = arith.constant 0 : index
    %143 = vector.load %arg13[%c224_101, %c0_102] : memref<784x70xbf16, #tpu.memory_space<vmem>>, vector<16x70xbf16>
    tpu.vector_store %arg13[%c224_101, %c0_102], %142 {strides = array<i32>} : memref<784x70xbf16, #tpu.memory_space<vmem>>, vector<16x70xbf16>,
    %144 = vector.extract_strided_slice %113 {offsets = [0, 218], sizes = [16, 70], strides = [1, 1]} : vector<16x416xbf16> to vector<16x70xbf16>
    %c240_103 = arith.constant 240 : index
    %c0_104 = arith.constant 0 : index
    %145 = vector.load %arg13[%c240_103, %c0_104] : memref<784x70xbf16, #tpu.memory_space<vmem>>, vector<16x70xbf16>
    tpu.vector_store %arg13[%c240_103, %c0_104], %144 {strides = array<i32>} : memref<784x70xbf16, #tpu.memory_space<vmem>>, vector<16x70xbf16>,
    %146 = vector.extract_strided_slice %113 {offsets = [0, 323], sizes = [16, 70], strides = [1, 1]} : vector<16x416xbf16> to vector<16x70xbf16>
    %c256 = arith.constant 256 : index
    %c0_105 = arith.constant 0 : index
    %147 = vector.load %arg13[%c256, %c0_105] : memref<784x70xbf16, #tpu.memory_space<vmem>>, vector<16x70xbf16>
    tpu.vector_store %arg13[%c256, %c0_105], %146 {strides = array<i32>} : memref<784x70xbf16, #tpu.memory_space<vmem>>, vector<16x70xbf16>,
    %148 = vector.extract_strided_slice %113 {offsets = [0, 219], sizes = [16, 70], strides = [1, 1]} : vector<16x416xbf16> to vector<16x70xbf16>
    %c272 = arith.constant 272 : index
    %c0_106 = arith.constant 0 : index
    %149 = vector.load %arg13[%c272, %c0_106] : memref<784x70xbf16, #tpu.memory_space<vmem>>, vector<16x70xbf16>
    tpu.vector_store %arg13[%c272, %c0_106], %148 {strides = array<i32>} : memref<784x70xbf16, #tpu.memory_space<vmem>>, vector<16x70xbf16>,
    %150 = vector.extract_strided_slice %113 {offsets = [0, 324], sizes = [16, 70], strides = [1, 1]} : vector<16x416xbf16> to vector<16x70xbf16>
    %c288 = arith.constant 288 : index
    %c0_107 = arith.constant 0 : index
    %151 = vector.load %arg13[%c288, %c0_107] : memref<784x70xbf16, #tpu.memory_space<vmem>>, vector<16x70xbf16>
    tpu.vector_store %arg13[%c288, %c0_107], %150 {strides = array<i32>} : memref<784x70xbf16, #tpu.memory_space<vmem>>, vector<16x70xbf16>,
    %152 = vector.extract_strided_slice %113 {offsets = [0, 220], sizes = [16, 70], strides = [1, 1]} : vector<16x416xbf16> to vector<16x70xbf16>
    %c304 = arith.constant 304 : index
    %c0_108 = arith.constant 0 : index
    %153 = vector.load %arg13[%c304, %c0_108] : memref<784x70xbf16, #tpu.memory_space<vmem>>, vector<16x70xbf16>
    tpu.vector_store %arg13[%c304, %c0_108], %152 {strides = array<i32>} : memref<784x70xbf16, #tpu.memory_space<vmem>>, vector<16x70xbf16>,
    %154 = vector.extract_strided_slice %113 {offsets = [0, 325], sizes = [16, 70], strides = [1, 1]} : vector<16x416xbf16> to vector<16x70xbf16>
    %c320 = arith.constant 320 : index
    %c0_109 = arith.constant 0 : index
    %155 = vector.load %arg13[%c320, %c0_109] : memref<784x70xbf16, #tpu.memory_space<vmem>>, vector<16x70xbf16>
    tpu.vector_store %arg13[%c320, %c0_109], %154 {strides = array<i32>} : memref<784x70xbf16, #tpu.memory_space<vmem>>, vector<16x70xbf16>,
    %156 = vector.extract_strided_slice %113 {offsets = [0, 114], sizes = [16, 70], strides = [1, 1]} : vector<16x416xbf16> to vector<16x70xbf16>
    %c336 = arith.constant 336 : index
    %c0_110 = arith.constant 0 : index
    %157 = vector.load %arg13[%c336, %c0_110] : memref<784x70xbf16, #tpu.memory_space<vmem>>, vector<16x70xbf16>
    tpu.vector_store %arg13[%c336, %c0_110], %156 {strides = array<i32>} : memref<784x70xbf16, #tpu.memory_space<vmem>>, vector<16x70xbf16>,
    %158 = vector.extract_strided_slice %113 {offsets = [0, 10], sizes = [16, 70], strides = [1, 1]} : vector<16x416xbf16> to vector<16x70xbf16>
    %c352 = arith.constant 352 : index
    %c0_111 = arith.constant 0 : index
    %159 = vector.load %arg13[%c352, %c0_111] : memref<784x70xbf16, #tpu.memory_space<vmem>>, vector<16x70xbf16>
    tpu.vector_store %arg13[%c352, %c0_111], %158 {strides = array<i32>} : memref<784x70xbf16, #tpu.memory_space<vmem>>, vector<16x70xbf16>,
    %160 = vector.extract_strided_slice %113 {offsets = [0, 115], sizes = [16, 70], strides = [1, 1]} : vector<16x416xbf16> to vector<16x70xbf16>
    %c368 = arith.constant 368 : index
    %c0_112 = arith.constant 0 : index
    %161 = vector.load %arg13[%c368, %c0_112] : memref<784x70xbf16, #tpu.memory_space<vmem>>, vector<16x70xbf16>
    tpu.vector_store %arg13[%c368, %c0_112], %160 {strides = array<i32>} : memref<784x70xbf16, #tpu.memory_space<vmem>>, vector<16x70xbf16>,
    %162 = vector.extract_strided_slice %113 {offsets = [0, 11], sizes = [16, 70], strides = [1, 1]} : vector<16x416xbf16> to vector<16x70xbf16>
    %c384 = arith.constant 384 : index
    %c0_113 = arith.constant 0 : index
    %163 = vector.load %arg13[%c384, %c0_113] : memref<784x70xbf16, #tpu.memory_space<vmem>>, vector<16x70xbf16>
    tpu.vector_store %arg13[%c384, %c0_113], %162 {strides = array<i32>} : memref<784x70xbf16, #tpu.memory_space<vmem>>, vector<16x70xbf16>,
    %164 = vector.extract_strided_slice %113 {offsets = [0, 116], sizes = [16, 70], strides = [1, 1]} : vector<16x416xbf16> to vector<16x70xbf16>
    %c400 = arith.constant 400 : index
    %c0_114 = arith.constant 0 : index
    %165 = vector.load %arg13[%c400, %c0_114] : memref<784x70xbf16, #tpu.memory_space<vmem>>, vector<16x70xbf16>
    tpu.vector_store %arg13[%c400, %c0_114], %164 {strides = array<i32>} : memref<784x70xbf16, #tpu.memory_space<vmem>>, vector<16x70xbf16>,
    %166 = vector.extract_strided_slice %113 {offsets = [0, 12], sizes = [16, 70], strides = [1, 1]} : vector<16x416xbf16> to vector<16x70xbf16>
    %c416 = arith.constant 416 : index
    %c0_115 = arith.constant 0 : index
    %167 = vector.load %arg13[%c416, %c0_115] : memref<784x70xbf16, #tpu.memory_space<vmem>>, vector<16x70xbf16>
    tpu.vector_store %arg13[%c416, %c0_115], %166 {strides = array<i32>} : memref<784x70xbf16, #tpu.memory_space<vmem>>, vector<16x70xbf16>,
    %168 = vector.extract_strided_slice %113 {offsets = [0, 117], sizes = [16, 70], strides = [1, 1]} : vector<16x416xbf16> to vector<16x70xbf16>
    %c432 = arith.constant 432 : index
    %c0_116 = arith.constant 0 : index
    %169 = vector.load %arg13[%c432, %c0_116] : memref<784x70xbf16, #tpu.memory_space<vmem>>, vector<16x70xbf16>
    tpu.vector_store %arg13[%c432, %c0_116], %168 {strides = array<i32>} : memref<784x70xbf16, #tpu.memory_space<vmem>>, vector<16x70xbf16>,
    %170 = vector.extract_strided_slice %113 {offsets = [0, 332], sizes = [16, 70], strides = [1, 1]} : vector<16x416xbf16> to vector<16x70xbf16>
    %c448 = arith.constant 448 : index
    %c0_117 = arith.constant 0 : index
    %171 = vector.load %arg13[%c448, %c0_117] : memref<784x70xbf16, #tpu.memory_space<vmem>>, vector<16x70xbf16>
    tpu.vector_store %arg13[%c448, %c0_117], %170 {strides = array<i32>} : memref<784x70xbf16, #tpu.memory_space<vmem>>, vector<16x70xbf16>,
    %172 = vector.extract_strided_slice %113 {offsets = [0, 228], sizes = [16, 70], strides = [1, 1]} : vector<16x416xbf16> to vector<16x70xbf16>
    %c464 = arith.constant 464 : index
    %c0_118 = arith.constant 0 : index
    %173 = vector.load %arg13[%c464, %c0_118] : memref<784x70xbf16, #tpu.memory_space<vmem>>, vector<16x70xbf16>
    tpu.vector_store %arg13[%c464, %c0_118], %172 {strides = array<i32>} : memref<784x70xbf16, #tpu.memory_space<vmem>>, vector<16x70xbf16>,
    %174 = vector.extract_strided_slice %113 {offsets = [0, 333], sizes = [16, 70], strides = [1, 1]} : vector<16x416xbf16> to vector<16x70xbf16>
    %c480 = arith.constant 480 : index
    %c0_119 = arith.constant 0 : index
    %175 = vector.load %arg13[%c480, %c0_119] : memref<784x70xbf16, #tpu.memory_space<vmem>>, vector<16x70xbf16>
    tpu.vector_store %arg13[%c480, %c0_119], %174 {strides = array<i32>} : memref<784x70xbf16, #tpu.memory_space<vmem>>, vector<16x70xbf16>,
    %176 = vector.extract_strided_slice %113 {offsets = [0, 229], sizes = [16, 70], strides = [1, 1]} : vector<16x416xbf16> to vector<16x70xbf16>
    %c496 = arith.constant 496 : index
    %c0_120 = arith.constant 0 : index
    %177 = vector.load %arg13[%c496, %c0_120] : memref<784x70xbf16, #tpu.memory_space<vmem>>, vector<16x70xbf16>
    tpu.vector_store %arg13[%c496, %c0_120], %176 {strides = array<i32>} : memref<784x70xbf16, #tpu.memory_space<vmem>>, vector<16x70xbf16>,
    %178 = vector.extract_strided_slice %113 {offsets = [0, 334], sizes = [16, 70], strides = [1, 1]} : vector<16x416xbf16> to vector<16x70xbf16>
    %c512 = arith.constant 512 : index
    %c0_121 = arith.constant 0 : index
    %179 = vector.load %arg13[%c512, %c0_121] : memref<784x70xbf16, #tpu.memory_space<vmem>>, vector<16x70xbf16>
    tpu.vector_store %arg13[%c512, %c0_121], %178 {strides = array<i32>} : memref<784x70xbf16, #tpu.memory_space<vmem>>, vector<16x70xbf16>,
    %180 = vector.extract_strided_slice %113 {offsets = [0, 230], sizes = [16, 70], strides = [1, 1]} : vector<16x416xbf16> to vector<16x70xbf16>
    %c528 = arith.constant 528 : index
    %c0_122 = arith.constant 0 : index
    %181 = vector.load %arg13[%c528, %c0_122] : memref<784x70xbf16, #tpu.memory_space<vmem>>, vector<16x70xbf16>
    tpu.vector_store %arg13[%c528, %c0_122], %180 {strides = array<i32>} : memref<784x70xbf16, #tpu.memory_space<vmem>>, vector<16x70xbf16>,
    %182 = vector.extract_strided_slice %113 {offsets = [0, 335], sizes = [16, 70], strides = [1, 1]} : vector<16x416xbf16> to vector<16x70xbf16>
    %c544 = arith.constant 544 : index
    %c0_123 = arith.constant 0 : index
    %183 = vector.load %arg13[%c544, %c0_123] : memref<784x70xbf16, #tpu.memory_space<vmem>>, vector<16x70xbf16>
    tpu.vector_store %arg13[%c544, %c0_123], %182 {strides = array<i32>} : memref<784x70xbf16, #tpu.memory_space<vmem>>, vector<16x70xbf16>,
    %184 = vector.extract_strided_slice %113 {offsets = [0, 124], sizes = [16, 70], strides = [1, 1]} : vector<16x416xbf16> to vector<16x70xbf16>
    %c560 = arith.constant 560 : index
    %c0_124 = arith.constant 0 : index
    %185 = vector.load %arg13[%c560, %c0_124] : memref<784x70xbf16, #tpu.memory_space<vmem>>, vector<16x70xbf16>
    tpu.vector_store %arg13[%c560, %c0_124], %184 {strides = array<i32>} : memref<784x70xbf16, #tpu.memory_space<vmem>>, vector<16x70xbf16>,
    %186 = vector.extract_strided_slice %113 {offsets = [0, 20], sizes = [16, 70], strides = [1, 1]} : vector<16x416xbf16> to vector<16x70xbf16>
    %c576 = arith.constant 576 : index
    %c0_125 = arith.constant 0 : index
    %187 = vector.load %arg13[%c576, %c0_125] : memref<784x70xbf16, #tpu.memory_space<vmem>>, vector<16x70xbf16>
    tpu.vector_store %arg13[%c576, %c0_125], %186 {strides = array<i32>} : memref<784x70xbf16, #tpu.memory_space<vmem>>, vector<16x70xbf16>,
    %188 = vector.extract_strided_slice %113 {offsets = [0, 125], sizes = [16, 70], strides = [1, 1]} : vector<16x416xbf16> to vector<16x70xbf16>
    %c592 = arith.constant 592 : index
    %c0_126 = arith.constant 0 : index
    %189 = vector.load %arg13[%c592, %c0_126] : memref<784x70xbf16, #tpu.memory_space<vmem>>, vector<16x70xbf16>
    tpu.vector_store %arg13[%c592, %c0_126], %188 {strides = array<i32>} : memref<784x70xbf16, #tpu.memory_space<vmem>>, vector<16x70xbf16>,
    %190 = vector.extract_strided_slice %113 {offsets = [0, 21], sizes = [16, 70], strides = [1, 1]} : vector<16x416xbf16> to vector<16x70xbf16>
    %c608 = arith.constant 608 : index
    %c0_127 = arith.constant 0 : index
    %191 = vector.load %arg13[%c608, %c0_127] : memref<784x70xbf16, #tpu.memory_space<vmem>>, vector<16x70xbf16>
    tpu.vector_store %arg13[%c608, %c0_127], %190 {strides = array<i32>} : memref<784x70xbf16, #tpu.memory_space<vmem>>, vector<16x70xbf16>,
    %192 = vector.extract_strided_slice %113 {offsets = [0, 126], sizes = [16, 70], strides = [1, 1]} : vector<16x416xbf16> to vector<16x70xbf16>
    %c624 = arith.constant 624 : index
    %c0_128 = arith.constant 0 : index
    %193 = vector.load %arg13[%c624, %c0_128] : memref<784x70xbf16, #tpu.memory_space<vmem>>, vector<16x70xbf16>
    tpu.vector_store %arg13[%c624, %c0_128], %192 {strides = array<i32>} : memref<784x70xbf16, #tpu.memory_space<vmem>>, vector<16x70xbf16>,
    %194 = vector.extract_strided_slice %113 {offsets = [0, 22], sizes = [16, 70], strides = [1, 1]} : vector<16x416xbf16> to vector<16x70xbf16>
    %c640 = arith.constant 640 : index
    %c0_129 = arith.constant 0 : index
    %195 = vector.load %arg13[%c640, %c0_129] : memref<784x70xbf16, #tpu.memory_space<vmem>>, vector<16x70xbf16>
    tpu.vector_store %arg13[%c640, %c0_129], %194 {strides = array<i32>} : memref<784x70xbf16, #tpu.memory_space<vmem>>, vector<16x70xbf16>,
    %196 = vector.extract_strided_slice %113 {offsets = [0, 127], sizes = [16, 70], strides = [1, 1]} : vector<16x416xbf16> to vector<16x70xbf16>
    %c656 = arith.constant 656 : index
    %c0_130 = arith.constant 0 : index
    %197 = vector.load %arg13[%c656, %c0_130] : memref<784x70xbf16, #tpu.memory_space<vmem>>, vector<16x70xbf16>
    tpu.vector_store %arg13[%c656, %c0_130], %196 {strides = array<i32>} : memref<784x70xbf16, #tpu.memory_space<vmem>>, vector<16x70xbf16>,
    %198 = vector.extract_strided_slice %113 {offsets = [0, 342], sizes = [16, 70], strides = [1, 1]} : vector<16x416xbf16> to vector<16x70xbf16>
    %c672 = arith.constant 672 : index
    %c0_131 = arith.constant 0 : index
    %199 = vector.load %arg13[%c672, %c0_131] : memref<784x70xbf16, #tpu.memory_space<vmem>>, vector<16x70xbf16>
    tpu.vector_store %arg13[%c672, %c0_131], %198 {strides = array<i32>} : memref<784x70xbf16, #tpu.memory_space<vmem>>, vector<16x70xbf16>,
    %200 = vector.extract_strided_slice %113 {offsets = [0, 238], sizes = [16, 70], strides = [1, 1]} : vector<16x416xbf16> to vector<16x70xbf16>
    %c688 = arith.constant 688 : index
    %c0_132 = arith.constant 0 : index
    %201 = vector.load %arg13[%c688, %c0_132] : memref<784x70xbf16, #tpu.memory_space<vmem>>, vector<16x70xbf16>
    tpu.vector_store %arg13[%c688, %c0_132], %200 {strides = array<i32>} : memref<784x70xbf16, #tpu.memory_space<vmem>>, vector<16x70xbf16>,
    %202 = vector.extract_strided_slice %113 {offsets = [0, 343], sizes = [16, 70], strides = [1, 1]} : vector<16x416xbf16> to vector<16x70xbf16>
    %c704 = arith.constant 704 : index
    %c0_133 = arith.constant 0 : index
    %203 = vector.load %arg13[%c704, %c0_133] : memref<784x70xbf16, #tpu.memory_space<vmem>>, vector<16x70xbf16>
    tpu.vector_store %arg13[%c704, %c0_133], %202 {strides = array<i32>} : memref<784x70xbf16, #tpu.memory_space<vmem>>, vector<16x70xbf16>,
    %204 = vector.extract_strided_slice %113 {offsets = [0, 239], sizes = [16, 70], strides = [1, 1]} : vector<16x416xbf16> to vector<16x70xbf16>
    %c720 = arith.constant 720 : index
    %c0_134 = arith.constant 0 : index
    %205 = vector.load %arg13[%c720, %c0_134] : memref<784x70xbf16, #tpu.memory_space<vmem>>, vector<16x70xbf16>
    tpu.vector_store %arg13[%c720, %c0_134], %204 {strides = array<i32>} : memref<784x70xbf16, #tpu.memory_space<vmem>>, vector<16x70xbf16>,
    %206 = vector.extract_strided_slice %113 {offsets = [0, 344], sizes = [16, 70], strides = [1, 1]} : vector<16x416xbf16> to vector<16x70xbf16>
    %c736 = arith.constant 736 : index
    %c0_135 = arith.constant 0 : index
    %207 = vector.load %arg13[%c736, %c0_135] : memref<784x70xbf16, #tpu.memory_space<vmem>>, vector<16x70xbf16>
    tpu.vector_store %arg13[%c736, %c0_135], %206 {strides = array<i32>} : memref<784x70xbf16, #tpu.memory_space<vmem>>, vector<16x70xbf16>,
    %208 = vector.extract_strided_slice %113 {offsets = [0, 240], sizes = [16, 70], strides = [1, 1]} : vector<16x416xbf16> to vector<16x70xbf16>
    %c752 = arith.constant 752 : index
    %c0_136 = arith.constant 0 : index
    %209 = vector.load %arg13[%c752, %c0_136] : memref<784x70xbf16, #tpu.memory_space<vmem>>, vector<16x70xbf16>
    tpu.vector_store %arg13[%c752, %c0_136], %208 {strides = array<i32>} : memref<784x70xbf16, #tpu.memory_space<vmem>>, vector<16x70xbf16>,
    %210 = vector.extract_strided_slice %113 {offsets = [0, 345], sizes = [16, 70], strides = [1, 1]} : vector<16x416xbf16> to vector<16x70xbf16>
    %c768 = arith.constant 768 : index
    %c0_137 = arith.constant 0 : index
    %211 = vector.load %arg13[%c768, %c0_137] : memref<784x70xbf16, #tpu.memory_space<vmem>>, vector<16x70xbf16>
    tpu.vector_store %arg13[%c768, %c0_137], %210 {strides = array<i32>} : memref<784x70xbf16, #tpu.memory_space<vmem>>, vector<16x70xbf16>,
    %c0_138 = arith.constant 0 : index
    %c0_139 = arith.constant 0 : index
    %212 = vector.load %arg8[%c0_138, %c0_139] : memref<12x784xbf16, #tpu.memory_space<vmem>>, vector<12x784xbf16>
    %c0_140 = arith.constant 0 : index
    %c0_141 = arith.constant 0 : index
    %213 = vector.load %arg13[%c0_140, %c0_141] : memref<784x70xbf16, #tpu.memory_space<vmem>>, vector<784x70xbf16>
    %cst_142 = arith.constant dense<0.000000e+00> : vector<12x70xf32>
    %214 = tpu.matmul %212, %213, %cst_142 {dimension_numbers = #tpu.dot_dimension_numbers<[1], [0], [0], [1], [0, 0, 1, 1], [], []>} : vector<12x784xbf16>, vector<784x70xbf16>, vector<12x70xf32> -> vector<12x70xf32>
    %c0_143 = arith.constant 0 : index
    %c0_144 = arith.constant 0 : index
    %215 = vector.load %arg9[%c0_143, %c0_144] : memref<12x1xf32, #tpu.memory_space<vmem>>, vector<12x1xf32>
    %216 = vector.broadcast %215 : vector<12x1xf32> to vector<12x70xf32>
    %217 = arith.addf %214, %216 : vector<12x70xf32>
    %cst_145 = arith.constant 0.000000e+00 : f32
    %218 = vector.broadcast %cst_145 : f32 to vector<12x70xf32>
    %219 = arith.subf %218, %217 : vector<12x70xf32>
    %220 = math.exp %219 : vector<12x70xf32>
    %cst_146 = arith.constant 1.000000e+00 : f32
    %221 = vector.broadcast %cst_146 : f32 to vector<12x70xf32>
    %222 = arith.addf %221, %220 : vector<12x70xf32>
    %223 = arith.divf %217, %222 : vector<12x70xf32>
    %c0_147 = arith.constant 0 : index
    %c0_148 = arith.constant 0 : index
    %c0_149 = arith.constant 0 : index
    %224 = vector.load %arg10[%c0_147, %c0_148, %c0_149] : memref<1x12x70xf32, #tpu.memory_space<vmem>>, vector<1x12x70xf32>
    %225 = vector.shape_cast %224 : vector<1x12x70xf32> to vector<12x70xf32>
    %226 = vector.shape_cast %223 : vector<12x70xf32> to vector<1x12x70xf32>
    tpu.vector_store %arg10[%c0_147, %c0_148, %c0_149], %226 {strides = array<i32>} : memref<1x12x70xf32, #tpu.memory_space<vmem>>, vector<1x12x70xf32>,
    return
  }
  func.func @transform_0(%arg0: i32) -> (i32, i32, i32) {
    %c0_i32 = arith.constant 0 : i32
    %c0_i32_0 = arith.constant 0 : i32
    %c0_i32_1 = arith.constant 0 : i32
    return %arg0, %c0_i32, %c0_i32_0 : i32, i32, i32
  }
  func.func @transform_1(%arg0: i32) -> (i32, i32) {
    %c0_i32 = arith.constant 0 : i32
    %c0_i32_0 = arith.constant 0 : i32
    %c0_i32_1 = arith.constant 0 : i32
    return %c0_i32, %c0_i32_0 : i32, i32
  }
  func.func @transform_2(%arg0: i32) -> (i32, i32) {
    %c0_i32 = arith.constant 0 : i32
    %c0_i32_0 = arith.constant 0 : i32
    %c0_i32_1 = arith.constant 0 : i32
    return %c0_i32, %c0_i32_0 : i32, i32
  }
  func.func @transform_3(%arg0: i32) -> (i32, i32) {
    %c0_i32 = arith.constant 0 : i32
    %c0_i32_0 = arith.constant 0 : i32
    %c0_i32_1 = arith.constant 0 : i32
    return %c0_i32, %c0_i32_0 : i32, i32
  }
  func.func @transform_4(%arg0: i32) -> (i32, i32) {
    %c0_i32 = arith.constant 0 : i32
    %c0_i32_0 = arith.constant 0 : i32
    %c0_i32_1 = arith.constant 0 : i32
    return %c0_i32, %c0_i32_0 : i32, i32
  }
  func.func @transform_5(%arg0: i32) -> (i32, i32) {
    %c0_i32 = arith.constant 0 : i32
    %c0_i32_0 = arith.constant 0 : i32
    %c0_i32_1 = arith.constant 0 : i32
    return %c0_i32, %c0_i32_0 : i32, i32
  }
  func.func @transform_6(%arg0: i32) -> (i32, i32) {
    %c0_i32 = arith.constant 0 : i32
    %c0_i32_0 = arith.constant 0 : i32
    %c0_i32_1 = arith.constant 0 : i32
    return %c0_i32, %c0_i32_0 : i32, i32
  }
  func.func @transform_7(%arg0: i32) -> (i32, i32) {
    %c0_i32 = arith.constant 0 : i32
    %c0_i32_0 = arith.constant 0 : i32
    %c0_i32_1 = arith.constant 0 : i32
    return %c0_i32, %c0_i32_0 : i32, i32
  }
  func.func @transform_8(%arg0: i32) -> (i32, i32) {
    %c0_i32 = arith.constant 0 : i32
    %c0_i32_0 = arith.constant 0 : i32
    %c0_i32_1 = arith.constant 0 : i32
    return %c0_i32, %c0_i32_0 : i32, i32
  }
  func.func @transform_9(%arg0: i32) -> (i32, i32, i32) {
    %c0_i32 = arith.constant 0 : i32
    %c0_i32_0 = arith.constant 0 : i32
    %c0_i32_1 = arith.constant 0 : i32
    return %arg0, %c0_i32, %c0_i32_0 : i32, i32, i32
  }
}

</mosaic_0001>

<llo_original>
// kernel: model_forward.1
$region0: #{model_forward.1}
  #allocation0 [shape = 'u32[]', space=smem, size = 0x4, offset = 0x4, fixed_abs, tag = 'smem constant byte address 0x4 - core index']
  #allocation1 [shape = 'u32[144,128]{1,0:T(1,128)}', space=vmem, size = 0x12000, scoped, tag = 'internal scratch']
  #allocation2 [shape = 'bf16[256,248]{1,0:T(16,128)(2,1)}', space=vmem, size = 0x20000, scoped, tag = 'scratch operand']
  #allocation3 [shape = 'bf16[128,248]{1,0:T(16,128)(2,1)}', space=vmem, size = 0x10000, scoped, tag = 'scratch operand']
  #allocation4 [shape = 'bf16[784,70]{1,0:T(16,128)(2,1)}', space=vmem, size = 0x31000, scoped, tag = 'scratch operand']
  %s0 = inlined_call_operand.vmem [shape: bf16[2,16,324], index: 0, kind: input, shape index: {}]
  %s1 = inlined_call_operand.vmem [shape: bf16[8,256], index: 1, kind: input, shape index: {}]
  %s2 = inlined_call_operand.vmem [shape: f32[8,1], index: 2, kind: input, shape index: {}]
  %s3 = inlined_call_operand.vmem [shape: f32[8,248], index: 3, kind: input, shape index: {}]
  %s4 = inlined_call_operand.vmem [shape: bf16[16,128], index: 4, kind: input, shape index: {}]
  %s5 = inlined_call_operand.vmem [shape: f32[16,1], index: 5, kind: input, shape index: {}]
  %s6 = inlined_call_operand.vmem [shape: bf16[248,416], index: 6, kind: input, shape index: {}]
  %s7 = inlined_call_operand.vmem [shape: bf16[12,784], index: 7, kind: input, shape index: {}]
  %s8 = inlined_call_operand.vmem [shape: f32[12,1], index: 8, kind: input, shape index: {}]
  %s9 = inlined_call_operand.vmem [shape: f32[2,12,70], index: 9, kind: output, shape index: {}]
  %s10 = sld [smem:[#allocation0]]
  $region69: #{model_forward.1} parent=0
    _
  %s12 = ssub.s32 1, %s10
  %s13 = scalar_select 0, %s12, %s10
  loop: start=0, step=1, limit=4
  $region2: #{model_forward.1} parent=0 // loop_pre_header
    _
  $region3: #{model_forward.1} parent=0 // loop_header
    %s15 = sphi 0, %s19
    %p16 = scmp.ge.s32.totalorder %s15, 4
    %s25 = sphi 0, %s27
    %s28 = sphi 0, %s25
    %s29 = sphi 0, %s28
    %s45 = sphi 0, %s29
    %s49 = sphi 0, %s49
    %s51 = sphi 0, %s49
    %s52 = sphi 0, %s51
    %s66 = sphi 0, %s52
    %s70 = sphi 0, %s70
    %s72 = sphi 0, %s70
    %s73 = sphi 0, %s72
    %s87 = sphi 0, %s73
    %s91 = sphi 0, %s91
    %s93 = sphi 0, %s91
    %s94 = sphi 0, %s93
    %s108 = sphi 0, %s94
    %s112 = sphi 0, %s112
    %s114 = sphi 0, %s112
    %s115 = sphi 0, %s114
    %s129 = sphi 0, %s115
    %s133 = sphi 0, %s133
    %s135 = sphi 0, %s133
    %s136 = sphi 0, %s135
    %s150 = sphi 0, %s136
    %s154 = sphi 0, %s154
    %s156 = sphi 0, %s154
    %s157 = sphi 0, %s156
    %s171 = sphi 0, %s157
    %s175 = sphi 0, %s175
    %s177 = sphi 0, %s175
    %s178 = sphi 0, %s177
    %s192 = sphi 0, %s178
    %s196 = sphi 0, %s196
    %s198 = sphi 0, %s196
    %s199 = sphi 0, %s198
    %s213 = sphi 0, %s199
    %s219 = sphi 0, %s221
    %s222 = sphi 0, %s219
    %s223 = sphi 0, %s222
    %s239 = sphi 0, %s223
  $region4: #{model_forward.1} parent=0 // loop_header_branch
    %18 = sbr.rel (%p16) target = $region8
  $region5: #{model_forward.1} parent=0 // loop_body
    %s20 = ssub.s32 %s15, 1
    %s21 = ssub.s32 %s15, 2
    %s22 = sadd.s32 %s15, 1
    %s23 = ssub.s32 %s15, %s22
    %p24 = scmp.eq.s32.totalorder %s23, 0
    %s26 = sadd.s32 %s25, 1
    %s27 = scalar_select %p24, %s25, %s26
    %p30 = pneg %p24
    %p31 = scmp.eq.s32.totalorder %s15, 1
    %p32 = por %p30, %p31
    %p33 = scmp.ne.s32.totalorder %s25, %s28
    %p34 = scmp.eq.s32.totalorder %s15, 0
    %p35 = por %p33, %p34
    %p36 = scmp.ne.s32.totalorder %s25, %s28
    %p37 = scmp.eq.s32.totalorder %s20, 1
    %p38 = por %p36, %p37
    %p39 = scmp.ne.s32.totalorder %s28, %s29
    %p40 = scmp.eq.s32.totalorder %s20, 0
    %p41 = por %p39, %p40
    %p42 = scmp.ne.s32.totalorder %s28, %s29
    %p43 = scmp.eq.s32.totalorder %s21, 1
    %p44 = por %p42, %p43
    %p46 = scmp.ne.s32.totalorder %s29, %s45
    %p47 = scmp.eq.s32.totalorder %s21, 0
    %p48 = por %p46, %p47
    %s50 = sadd.s32 %s49, 1
    %p53 = scmp.eq.s32.totalorder %s15, 1
    %p54 = scmp.ne.s32.totalorder %s49, %s51
    %p55 = scmp.eq.s32.totalorder %s15, 0
    %p56 = por %p54, %p55
    %p57 = scmp.ne.s32.totalorder %s49, %s51
    %p58 = scmp.eq.s32.totalorder %s20, 1
    %p59 = por %p57, %p58
    %p60 = scmp.ne.s32.totalorder %s51, %s52
    %p61 = scmp.eq.s32.totalorder %s20, 0
    %p62 = por %p60, %p61
    %p63 = scmp.ne.s32.totalorder %s51, %s52
    %p64 = scmp.eq.s32.totalorder %s21, 1
    %p65 = por %p63, %p64
    %p67 = scmp.ne.s32.totalorder %s52, %s66
    %p68 = scmp.eq.s32.totalorder %s21, 0
    %p69 = por %p67, %p68
    %s71 = sadd.s32 %s70, 1
    %p74 = scmp.eq.s32.totalorder %s15, 1
    %p75 = scmp.ne.s32.totalorder %s70, %s72
    %p76 = scmp.eq.s32.totalorder %s15, 0
    %p77 = por %p75, %p76
    %p78 = scmp.ne.s32.totalorder %s70, %s72
    %p79 = scmp.eq.s32.totalorder %s20, 1
    %p80 = por %p78, %p79
    %p81 = scmp.ne.s32.totalorder %s72, %s73
    %p82 = scmp.eq.s32.totalorder %s20, 0
    %p83 = por %p81, %p82
    %p84 = scmp.ne.s32.totalorder %s72, %s73
    %p85 = scmp.eq.s32.totalorder %s21, 1
    %p86 = por %p84, %p85
    %p88 = scmp.ne.s32.totalorder %s73, %s87
    %p89 = scmp.eq.s32.totalorder %s21, 0
    %p90 = por %p88, %p89
    %s92 = sadd.s32 %s91, 1
    %p95 = scmp.eq.s32.totalorder %s15, 1
    %p96 = scmp.ne.s32.totalorder %s91, %s93
    %p97 = scmp.eq.s32.totalorder %s15, 0
    %p98 = por %p96, %p97
    %p99 = scmp.ne.s32.totalorder %s91, %s93
    %p100 = scmp.eq.s32.totalorder %s20, 1
    %p101 = por %p99, %p100
    %p102 = scmp.ne.s32.totalorder %s93, %s94
    %p103 = scmp.eq.s32.totalorder %s20, 0
    %p104 = por %p102, %p103
    %p105 = scmp.ne.s32.totalorder %s93, %s94
    %p106 = scmp.eq.s32.totalorder %s21, 1
    %p107 = por %p105, %p106
    %p109 = scmp.ne.s32.totalorder %s94, %s108
    %p110 = scmp.eq.s32.totalorder %s21, 0
    %p111 = por %p109, %p110
    %s113 = sadd.s32 %s112, 1
    %p116 = scmp.eq.s32.totalorder %s15, 1
    %p117 = scmp.ne.s32.totalorder %s112, %s114
    %p118 = scmp.eq.s32.totalorder %s15, 0
    %p119 = por %p117, %p118
    %p120 = scmp.ne.s32.totalorder %s112, %s114
    %p121 = scmp.eq.s32.totalorder %s20, 1
    %p122 = por %p120, %p121
    %p123 = scmp.ne.s32.totalorder %s114, %s115
    %p124 = scmp.eq.s32.totalorder %s20, 0
    %p125 = por %p123, %p124
    %p126 = scmp.ne.s32.totalorder %s114, %s115
    %p127 = scmp.eq.s32.totalorder %s21, 1
    %p128 = por %p126, %p127
    %p130 = scmp.ne.s32.totalorder %s115, %s129
    %p131 = scmp.eq.s32.totalorder %s21, 0
    %p132 = por %p130, %p131
    %s134 = sadd.s32 %s133, 1
    %p137 = scmp.eq.s32.totalorder %s15, 1
    %p138 = scmp.ne.s32.totalorder %s133, %s135
    %p139 = scmp.eq.s32.totalorder %s15, 0
    %p140 = por %p138, %p139
    %p141 = scmp.ne.s32.totalorder %s133, %s135
    %p142 = scmp.eq.s32.totalorder %s20, 1
    %p143 = por %p141, %p142
    %p144 = scmp.ne.s32.totalorder %s135, %s136
    %p145 = scmp.eq.s32.totalorder %s20, 0
    %p146 = por %p144, %p145
    %p147 = scmp.ne.s32.totalorder %s135, %s136
    %p148 = scmp.eq.s32.totalorder %s21, 1
    %p149 = por %p147, %p148
    %p151 = scmp.ne.s32.totalorder %s136, %s150
    %p152 = scmp.eq.s32.totalorder %s21, 0
    %p153 = por %p151, %p152
    %s155 = sadd.s32 %s154, 1
    %p158 = scmp.eq.s32.totalorder %s15, 1
    %p159 = scmp.ne.s32.totalorder %s154, %s156
    %p160 = scmp.eq.s32.totalorder %s15, 0
    %p161 = por %p159, %p160
    %p162 = scmp.ne.s32.totalorder %s154, %s156
    %p163 = scmp.eq.s32.totalorder %s20, 1
    %p164 = por %p162, %p163
    %p165 = scmp.ne.s32.totalorder %s156, %s157
    %p166 = scmp.eq.s32.totalorder %s20, 0
    %p167 = por %p165, %p166
    %p168 = scmp.ne.s32.totalorder %s156, %s157
    %p169 = scmp.eq.s32.totalorder %s21, 1
    %p170 = por %p168, %p169
    %p172 = scmp.ne.s32.totalorder %s157, %s171
    %p173 = scmp.eq.s32.totalorder %s21, 0
    %p174 = por %p172, %p173
    %s176 = sadd.s32 %s175, 1
    %p179 = scmp.eq.s32.totalorder %s15, 1
    %p180 = scmp.ne.s32.totalorder %s175, %s177
    %p181 = scmp.eq.s32.totalorder %s15, 0
    %p182 = por %p180, %p181
    %p183 = scmp.ne.s32.totalorder %s175, %s177
    %p184 = scmp.eq.s32.totalorder %s20, 1
    %p185 = por %p183, %p184
    %p186 = scmp.ne.s32.totalorder %s177, %s178
    %p187 = scmp.eq.s32.totalorder %s20, 0
    %p188 = por %p186, %p187
    %p189 = scmp.ne.s32.totalorder %s177, %s178
    %p190 = scmp.eq.s32.totalorder %s21, 1
    %p191 = por %p189, %p190
    %p193 = scmp.ne.s32.totalorder %s178, %s192
    %p194 = scmp.eq.s32.totalorder %s21, 0
    %p195 = por %p193, %p194
    %s197 = sadd.s32 %s196, 1
    %p200 = scmp.eq.s32.totalorder %s15, 1
    %p201 = scmp.ne.s32.totalorder %s196, %s198
    %p202 = scmp.eq.s32.totalorder %s15, 0
    %p203 = por %p201, %p202
    %p204 = scmp.ne.s32.totalorder %s196, %s198
    %p205 = scmp.eq.s32.totalorder %s20, 1
    %p206 = por %p204, %p205
    %p207 = scmp.ne.s32.totalorder %s198, %s199
    %p208 = scmp.eq.s32.totalorder %s20, 0
    %p209 = por %p207, %p208
    %p210 = scmp.ne.s32.totalorder %s198, %s199
    %p211 = scmp.eq.s32.totalorder %s21, 1
    %p212 = por %p210, %p211
    %p214 = scmp.ne.s32.totalorder %s199, %s213
    %p215 = scmp.eq.s32.totalorder %s21, 0
    %p216 = por %p214, %p215
    %s217 = ssub.s32 %s15, %s22
    %p218 = scmp.eq.s32.totalorder %s217, 0
    %s220 = sadd.s32 %s219, 1
    %s221 = scalar_select %p218, %s219, %s220
    %p224 = pneg %p218
    %p225 = scmp.eq.s32.totalorder %s15, 1
    %p226 = por %p224, %p225
    %p227 = scmp.ne.s32.totalorder %s219, %s222
    %p228 = scmp.eq.s32.totalorder %s15, 0
    %p229 = por %p227, %p228
    %p230 = scmp.ne.s32.totalorder %s219, %s222
    %p231 = scmp.eq.s32.totalorder %s20, 1
    %p232 = por %p230, %p231
    %p233 = scmp.ne.s32.totalorder %s222, %s223
    %p234 = scmp.eq.s32.totalorder %s20, 0
    %p235 = por %p233, %p234
    %p236 = scmp.ne.s32.totalorder %s222, %s223
    %p237 = scmp.eq.s32.totalorder %s21, 1
    %p238 = por %p236, %p237
    %p240 = scmp.ne.s32.totalorder %s223, %s239
    %p241 = scmp.eq.s32.totalorder %s21, 0
    %p242 = por %p240, %p241
    %p243 = scmp.le.s32.totalorder 1, %s15
    %p244 = scmp.lt.s32.totalorder %s15, 3
    %p245 = pnand %p243, %p244
    %p246 = pneg %p245
    // Predicated region
    $region9: #{model_forward.1} parent=5 // pred_check
      _
    $region10: #{model_forward.1} parent=5 // pred_check_branch
      %248 = sbr.rel (%p245) target = $region12
    $region11: #{model_forward.1} parent=5 // pred_region
      %s249 = ssub.s32 %s15, 1
      // Predicated region
      $region13: #{model_forward.1} parent=11 // pred_check
        %p250 = pneg %p62
      $region14: #{model_forward.1} parent=11 // pred_check_branch
        %252 = sbr.rel (%p250) target = $region16
      $region15: #{model_forward.1} parent=11 // pred_region
        _
      $region16: #{model_forward.1} parent=11 // pred_fallthru
        _
      // Predicated region
      $region17: #{model_forward.1} parent=11 // pred_check
        %p253 = pneg %p83
      $region18: #{model_forward.1} parent=11 // pred_check_branch
        %255 = sbr.rel (%p253) target = $region20
      $region19: #{model_forward.1} parent=11 // pred_region
        _
      $region20: #{model_forward.1} parent=11 // pred_fallthru
        _
      // Predicated region
      $region21: #{model_forward.1} parent=11 // pred_check
        %p256 = pneg %p104
      $region22: #{model_forward.1} parent=11 // pred_check_branch
        %258 = sbr.rel (%p256) target = $region24
      $region23: #{model_forward.1} parent=11 // pred_region
        _
      $region24: #{model_forward.1} parent=11 // pred_fallthru
        _
      // Predicated region
      $region25: #{model_forward.1} parent=11 // pred_check
        %p259 = pneg %p125
      $region26: #{model_forward.1} parent=11 // pred_check_branch
        %261 = sbr.rel (%p259) target = $region28
      $region27: #{model_forward.1} parent=11 // pred_region
        _
      $region28: #{model_forward.1} parent=11 // pred_fallthru
        _
      // Predicated region
      $region29: #{model_forward.1} parent=11 // pred_check
        %p262 = pneg %p146
      $region30: #{model_forward.1} parent=11 // pred_check_branch
        %264 = sbr.rel (%p262) target = $region32
      $region31: #{model_forward.1} parent=11 // pred_region
        _
      $region32: #{model_forward.1} parent=11 // pred_fallthru
        _
      // Predicated region
      $region33: #{model_forward.1} parent=11 // pred_check
        %p265 = pneg %p167
      $region34: #{model_forward.1} parent=11 // pred_check_branch
        %267 = sbr.rel (%p265) target = $region36
      $region35: #{model_forward.1} parent=11 // pred_region
        _
      $region36: #{model_forward.1} parent=11 // pred_fallthru
        _
      // Predicated region
      $region37: #{model_forward.1} parent=11 // pred_check
        %p268 = pneg %p188
      $region38: #{model_forward.1} parent=11 // pred_check_branch
        %270 = sbr.rel (%p268) target = $region40
      $region39: #{model_forward.1} parent=11 // pred_region
        _
      $region40: #{model_forward.1} parent=11 // pred_fallthru
        _
      // Predicated region
      $region41: #{model_forward.1} parent=11 // pred_check
        %p271 = pneg %p209
      $region42: #{model_forward.1} parent=11 // pred_check_branch
        %273 = sbr.rel (%p271) target = $region44
      $region43: #{model_forward.1} parent=11 // pred_region
        _
      $region44: #{model_forward.1} parent=11 // pred_fallthru
        _
    $region12: #{model_forward.1} parent=5 // pred_fallthru
      _
    %p274 = scmp.lt.s32.totalorder %s15, 2
    // Predicated region
    $region45: #{model_forward.1} parent=5 // pred_check
      %p275 = pneg %p274
    $region46: #{model_forward.1} parent=5 // pred_check_branch
      %277 = sbr.rel (%p275) target = $region48
    $region47: #{model_forward.1} parent=5 // pred_region
      // Predicated region
      $region49: #{model_forward.1} parent=47 // pred_check
        %p278 = pneg %p35
      $region50: #{model_forward.1} parent=47 // pred_check_branch
        %280 = sbr.rel (%p278) target = $region52
      $region51: #{model_forward.1} parent=47 // pred_region
        %p281 = scmp.lt.s32.totalorder %s15, 1
        %s282 = scalar_select %p281, %s15, 1
        %s283 = smul.addr %s282, 6
        %s284 = smul.addr %s283, 4
        %s285 = scalar_lea.vmem %s0, %s284
      $region52: #{model_forward.1} parent=47 // pred_fallthru
        _
    $region48: #{model_forward.1} parent=5 // pred_fallthru
      _
    %p286 = scmp.le.s32.totalorder 1, %s15
    %p287 = scmp.lt.s32.totalorder %s15, 3
    %p288 = pnand %p286, %p287
    %p289 = pneg %p288
    // Predicated region
    $region53: #{model_forward.1} parent=5 // pred_check
      _
    $region54: #{model_forward.1} parent=5 // pred_check_branch
      %291 = sbr.rel (%p288) target = $region56
    $region55: #{model_forward.1} parent=5 // pred_region
      %s292 = ssub.s32 %s15, 1
      %p293 = scmp.lt.s32.totalorder %s20, 1
      %s294 = scalar_select %p293, %s20, 1
      %s295 = smul.addr %s294, 6
      %s296 = smul.addr %s295, 4
      %s297 = scalar_lea.vmem %s0, %s296
      %p298 = pneg %p41
      %p299 = pneg %p38
      %p300 = pneg %p62
      %p301 = pneg %p59
      %p302 = pneg %p83
      %p303 = pneg %p80
      %p304 = pneg %p104
      %p305 = pneg %p101
      %p306 = pneg %p125
      %p307 = pneg %p122
      %p308 = pneg %p146
      %p309 = pneg %p143
      %p310 = pneg %p167
      %p311 = pneg %p164
      %p312 = pneg %p188
      %p313 = pneg %p185
      %p314 = pneg %p209
      %p315 = pneg %p206
      %p316 = pneg %p235
      %p317 = pneg %p232
      %p318 = scmp.lt.s32.totalorder %s20, 1
      %s319 = scalar_select %p318, %s20, 1
      %s320 = smul.addr %s319, 2
      %s321 = smul.addr %s320, 8
      %s322 = scalar_lea.vmem %s9, %s321
      %p323 = scmp.lt.s32.totalorder %s20, 1
      %s324 = scalar_select %p323, %s20, 1
      %s325 = smul.addr %s324, 6
      %s326 = smul.addr %s325, 4
      %s327 = scalar_lea.vmem %s0, %s326
      %p328 = scmp.lt.s32.totalorder %s20, 1
      %s329 = scalar_select %p328, %s20, 1
      %s330 = smul.addr %s329, 2
      %s331 = smul.addr %s330, 8
      %s332 = scalar_lea.vmem %s9, %s331
      %v334 = vld [vmem:[%s327] sm:$0xff]
      %v335 = vld [vmem:[%s327 + $0x8] sm:$0xf]
      %v336 = vld [vmem:[%s327 + $0xc] sm:$0xff]
      %v337 = vld [vmem:[%s327 + $0x14] sm:$0xf]
      %v342 = vunpack.c.l.b16 %v334
      %v343 = vunpack.c.h.b16 %v334
      %v344 = vunpack.c.l.b16 %v335
      %v345 = vunpack.c.l.b16 %v336
      %v346 = vunpack.c.h.b16 %v336
      %v347 = vunpack.c.l.b16 %v337
      %v348 = vpack.c.b16 %v345, %v342
      %v349 = vpack.c.b16 %v346, %v343
      %v350 = vpack.c.b16 %v347, %v344
      %351 = vrot.lane.b32.xlu0 %v348, 109
      %v352 = vpop.permute.xlu0 %351
      %353 = vrot.lane.b32.xlu0 %v349, 109
      %v354 = vpop.permute.xlu0 %353
      %355 = vrot.lane.b32.xlu0 %v350, 109
      %v356 = vpop.permute.xlu0 %355
      %vm357 = vcmask 891904
      %v358 = vsel %vm357, %v352, %v354
      %v359 = vsel %vm357, %v354, %v356
      %362 = vst [vmem:[#allocation2] sm:$0xff] %v358
      %vm363 = vcmask 982016
      %364 = vst.msk [vmem:[#allocation2 + $0x8] sm:$0xff] %vm363, %v359
      %365 = vrot.lane.b32.xlu0 %v348, 108
      %v366 = vpop.permute.xlu0 %365
      %367 = vrot.lane.b32.xlu0 %v349, 108
      %v368 = vpop.permute.xlu0 %367
      %369 = vrot.lane.b32.xlu0 %v350, 108
      %v370 = vpop.permute.xlu0 %369
      %vm371 = vcmask 883712
      %v372 = vsel %vm371, %v366, %v368
      %v373 = vsel %vm371, %v368, %v370
      %376 = vst [vmem:[#allocation2 + $0x10] sm:$0xff] %v372
      %377 = vst.msk [vmem:[#allocation2 + $0x18] sm:$0xff] %vm363, %v373
      %378 = vrot.lane.b32.xlu0 %v348, 107
      %v379 = vpop.permute.xlu0 %378
      %380 = vrot.lane.b32.xlu0 %v349, 107
      %v381 = vpop.permute.xlu0 %380
      %382 = vrot.lane.b32.xlu0 %v350, 107
      %v383 = vpop.permute.xlu0 %382
      %vm384 = vcmask 875520
      %v385 = vsel %vm384, %v379, %v381
      %v386 = vsel %vm384, %v381, %v383
      %389 = vst [vmem:[#allocation2 + $0x20] sm:$0xff] %v385
      %390 = vst.msk [vmem:[#allocation2 + $0x28] sm:$0xff] %vm363, %v386
      %391 = vrot.lane.b32.xlu0 %v348, 106
      %v392 = vpop.permute.xlu0 %391
      %393 = vrot.lane.b32.xlu0 %v349, 106
      %v394 = vpop.permute.xlu0 %393
      %395 = vrot.lane.b32.xlu0 %v350, 106
      %v396 = vpop.permute.xlu0 %395
      %vm397 = vcmask 867328
      %v398 = vsel %vm397, %v392, %v394
      %v399 = vsel %vm397, %v394, %v396
      %402 = vst [vmem:[#allocation2 + $0x30] sm:$0xff] %v398
      %403 = vst.msk [vmem:[#allocation2 + $0x38] sm:$0xff] %vm363, %v399
      %404 = vrot.lane.b32.xlu0 %v348, 91
      %v405 = vpop.permute.xlu0 %404
      %406 = vrot.lane.b32.xlu0 %v349, 91
      %v407 = vpop.permute.xlu0 %406
      %408 = vrot.lane.b32.xlu0 %v350, 91
      %v409 = vpop.permute.xlu0 %408
      %vm410 = vcmask 744448
      %v411 = vsel %vm410, %v405, %v407
      %v412 = vsel %vm410, %v407, %v409
      %415 = vst [vmem:[#allocation2 + $0x40] sm:$0xff] %v411
      %416 = vst.msk [vmem:[#allocation2 + $0x48] sm:$0xff] %vm363, %v412
      %417 = vrot.lane.b32.xlu0 %v348, 90
      %v418 = vpop.permute.xlu0 %417
      %419 = vrot.lane.b32.xlu0 %v349, 90
      %v420 = vpop.permute.xlu0 %419
      %421 = vrot.lane.b32.xlu0 %v350, 90
      %v422 = vpop.permute.xlu0 %421
      %vm423 = vcmask 736256
      %v424 = vsel %vm423, %v418, %v420
      %v425 = vsel %vm423, %v420, %v422
      %428 = vst [vmem:[#allocation2 + $0x50] sm:$0xff] %v424
      %429 = vst.msk [vmem:[#allocation2 + $0x58] sm:$0xff] %vm363, %v425
      %430 = vrot.lane.b32.xlu0 %v348, 89
      %v431 = vpop.permute.xlu0 %430
      %432 = vrot.lane.b32.xlu0 %v349, 89
      %v433 = vpop.permute.xlu0 %432
      %434 = vrot.lane.b32.xlu0 %v350, 89
      %v435 = vpop.permute.xlu0 %434
      %vm436 = vcmask 728064
      %v437 = vsel %vm436, %v431, %v433
      %v438 = vsel %vm436, %v433, %v435
      %441 = vst [vmem:[#allocation2 + $0x60] sm:$0xff] %v437
      %442 = vst.msk [vmem:[#allocation2 + $0x68] sm:$0xff] %vm363, %v438
      %443 = vrot.lane.b32.xlu0 %v348, 88
      %v444 = vpop.permute.xlu0 %443
      %445 = vrot.lane.b32.xlu0 %v349, 88
      %v446 = vpop.permute.xlu0 %445
      %447 = vrot.lane.b32.xlu0 %v350, 88
      %v448 = vpop.permute.xlu0 %447
      %vm449 = vcmask 719872
      %v450 = vsel %vm449, %v444, %v446
      %v451 = vsel %vm449, %v446, %v448
      %454 = vst [vmem:[#allocation2 + $0x70] sm:$0xff] %v450
      %455 = vst.msk [vmem:[#allocation2 + $0x78] sm:$0xff] %vm363, %v451
      %456 = vrot.lane.b32.xlu0 %v348, 73
      %v457 = vpop.permute.xlu0 %456
      %458 = vrot.lane.b32.xlu0 %v349, 73
      %v459 = vpop.permute.xlu0 %458
      %460 = vrot.lane.b32.xlu0 %v350, 73
      %v461 = vpop.permute.xlu0 %460
      %vm462 = vcmask 596992
      %v463 = vsel %vm462, %v457, %v459
      %v464 = vsel %vm462, %v459, %v461
      %467 = vst [vmem:[#allocation2 + $0x80] sm:$0xff] %v463
      %468 = vst.msk [vmem:[#allocation2 + $0x88] sm:$0xff] %vm363, %v464
      %469 = vrot.lane.b32.xlu0 %v348, 72
      %v470 = vpop.permute.xlu0 %469
      %471 = vrot.lane.b32.xlu0 %v349, 72
      %v472 = vpop.permute.xlu0 %471
      %473 = vrot.lane.b32.xlu0 %v350, 72
      %v474 = vpop.permute.xlu0 %473
      %vm475 = vcmask 588800
      %v476 = vsel %vm475, %v470, %v472
      %v477 = vsel %vm475, %v472, %v474
      %480 = vst [vmem:[#allocation2 + $0x90] sm:$0xff] %v476
      %481 = vst.msk [vmem:[#allocation2 + $0x98] sm:$0xff] %vm363, %v477
      %482 = vrot.lane.b32.xlu0 %v348, 71
      %v483 = vpop.permute.xlu0 %482
      %484 = vrot.lane.b32.xlu0 %v349, 71
      %v485 = vpop.permute.xlu0 %484
      %486 = vrot.lane.b32.xlu0 %v350, 71
      %v487 = vpop.permute.xlu0 %486
      %vm488 = vcmask 580608
      %v489 = vsel %vm488, %v483, %v485
      %v490 = vsel %vm488, %v485, %v487
      %493 = vst [vmem:[#allocation2 + $0xa0] sm:$0xff] %v489
      %494 = vst.msk [vmem:[#allocation2 + $0xa8] sm:$0xff] %vm363, %v490
      %495 = vrot.lane.b32.xlu0 %v348, 70
      %v496 = vpop.permute.xlu0 %495
      %497 = vrot.lane.b32.xlu0 %v349, 70
      %v498 = vpop.permute.xlu0 %497
      %499 = vrot.lane.b32.xlu0 %v350, 70
      %v500 = vpop.permute.xlu0 %499
      %vm501 = vcmask 572416
      %v502 = vsel %vm501, %v496, %v498
      %v503 = vsel %vm501, %v498, %v500
      %506 = vst [vmem:[#allocation2 + $0xb0] sm:$0xff] %v502
      %507 = vst.msk [vmem:[#allocation2 + $0xb8] sm:$0xff] %vm363, %v503
      %508 = vrot.lane.b32.xlu0 %v348, 55
      %v509 = vpop.permute.xlu0 %508
      %510 = vrot.lane.b32.xlu0 %v349, 55
      %v511 = vpop.permute.xlu0 %510
      %512 = vrot.lane.b32.xlu0 %v350, 55
      %v513 = vpop.permute.xlu0 %512
      %vm514 = vcmask 449536
      %v515 = vsel %vm514, %v509, %v511
      %v516 = vsel %vm514, %v511, %v513
      %519 = vst [vmem:[#allocation2 + $0xc0] sm:$0xff] %v515
      %520 = vst.msk [vmem:[#allocation2 + $0xc8] sm:$0xff] %vm363, %v516
      %521 = vrot.lane.b32.xlu0 %v348, 54
      %v522 = vpop.permute.xlu0 %521
      %523 = vrot.lane.b32.xlu0 %v349, 54
      %v524 = vpop.permute.xlu0 %523
      %525 = vrot.lane.b32.xlu0 %v350, 54
      %v526 = vpop.permute.xlu0 %525
      %vm527 = vcmask 441344
      %v528 = vsel %vm527, %v522, %v524
      %v529 = vsel %vm527, %v524, %v526
      %532 = vst [vmem:[#allocation2 + $0xd0] sm:$0xff] %v528
      %533 = vst.msk [vmem:[#allocation2 + $0xd8] sm:$0xff] %vm363, %v529
      %534 = vrot.lane.b32.xlu0 %v348, 53
      %v535 = vpop.permute.xlu0 %534
      %536 = vrot.lane.b32.xlu0 %v349, 53
      %v537 = vpop.permute.xlu0 %536
      %538 = vrot.lane.b32.xlu0 %v350, 53
      %v539 = vpop.permute.xlu0 %538
      %vm540 = vcmask 433152
      %v541 = vsel %vm540, %v535, %v537
      %v542 = vsel %vm540, %v537, %v539
      %545 = vst [vmem:[#allocation2 + $0xe0] sm:$0xff] %v541
      %546 = vst.msk [vmem:[#allocation2 + $0xe8] sm:$0xff] %vm363, %v542
      %547 = vrot.lane.b32.xlu0 %v348, 52
      %v548 = vpop.permute.xlu0 %547
      %549 = vrot.lane.b32.xlu0 %v349, 52
      %v550 = vpop.permute.xlu0 %549
      %551 = vrot.lane.b32.xlu0 %v350, 52
      %v552 = vpop.permute.xlu0 %551
      %vm553 = vcmask 424960
      %v554 = vsel %vm553, %v548, %v550
      %v555 = vsel %vm553, %v550, %v552
      %558 = vst [vmem:[#allocation2 + $0xf0] sm:$0xff] %v554
      %559 = vst.msk [vmem:[#allocation2 + $0xf8] sm:$0xff] %vm363, %v555
      %v560 = vld [vmem:[%s1] sm:$0xff]
      %v561 = vld [vmem:[#allocation2] sm:$0xff]
      %v562 = vld [vmem:[#allocation2 + $0x8] sm:$0xff]
      %v563 = vld [vmem:[#allocation2 + $0x10] sm:$0xff]
      %v564 = vld [vmem:[#allocation2 + $0x18] sm:$0xff]
      %v565 = vld [vmem:[#allocation2 + $0x20] sm:$0xff]
      %v566 = vld [vmem:[#allocation2 + $0x28] sm:$0xff]
      %v567 = vld [vmem:[#allocation2 + $0x30] sm:$0xff]
      %v568 = vld [vmem:[#allocation2 + $0x38] sm:$0xff]
      %v569 = vld [vmem:[#allocation2 + $0x40] sm:$0xff]
      %v570 = vld [vmem:[#allocation2 + $0x48] sm:$0xff]
      %v571 = vld [vmem:[#allocation2 + $0x50] sm:$0xff]
      %v572 = vld [vmem:[#allocation2 + $0x58] sm:$0xff]
      %v573 = vld [vmem:[#allocation2 + $0x60] sm:$0xff]
      %v574 = vld [vmem:[#allocation2 + $0x68] sm:$0xff]
      %v575 = vld [vmem:[#allocation2 + $0x70] sm:$0xff]
      %v576 = vld [vmem:[#allocation2 + $0x78] sm:$0xff]
      %v577 = vld [vmem:[#allocation2 + $0x80] sm:$0xff]
      %v578 = vld [vmem:[#allocation2 + $0x88] sm:$0xff]
      %v579 = vld [vmem:[#allocation2 + $0x90] sm:$0xff]
      %v580 = vld [vmem:[#allocation2 + $0x98] sm:$0xff]
      %v581 = vld [vmem:[#allocation2 + $0xa0] sm:$0xff]
      %v582 = vld [vmem:[#allocation2 + $0xa8] sm:$0xff]
      %v583 = vld [vmem:[#allocation2 + $0xb0] sm:$0xff]
      %v584 = vld [vmem:[#allocation2 + $0xb8] sm:$0xff]
      %v585 = vld [vmem:[#allocation2 + $0xc0] sm:$0xff]
      %v586 = vld [vmem:[#allocation2 + $0xc8] sm:$0xff]
      %v587 = vld [vmem:[#allocation2 + $0xd0] sm:$0xff]
      %v588 = vld [vmem:[#allocation2 + $0xd8] sm:$0xff]
      %v589 = vld [vmem:[#allocation2 + $0xe0] sm:$0xff]
      %v590 = vld [vmem:[#allocation2 + $0xe8] sm:$0xff]
      %v591 = vld [vmem:[#allocation2 + $0xf0] sm:$0xff]
      %v592 = vld [vmem:[#allocation2 + $0xf8] sm:$0xff]
      %v593 = vld [vmem:[%s2] sm:$0xff]
      %595 = vset.pattern.permute.xlu0 0
      %596 = vperm.xlu0 %595, %v593
      %v597 = vpop.permute.xlu0 %596
      %v600 = vunpack.c.l.b16 %v560
      %v601 = vunpack.c.h.b16 %v560
      %v602 = vpack.c.b16 %v600, %v600
      %v603 = vpack.c.b16 %v601, %v601
      %606 = vmatprep.subr.bf16.mxu0 %v562
      %607 = vmatpush1.bf16.msra.mxu0 %v561
      %608 = vmatprep.subr.bf16.mxu0 %v564
      %609 = vmatpush1.bf16.msra.mxu0 %v563
      %610 = vmatprep.subr.bf16.mxu0 %v566
      %611 = vmatpush1.bf16.msra.mxu0 %v565
      %612 = vmatprep.subr.bf16.mxu0 %v568
      %613 = vmatpush1.bf16.msra.mxu0 %v567
      %614 = vmatprep.subr.bf16.mxu0 %v570
      %615 = vmatpush1.bf16.msra.mxu0 %v569
      %616 = vmatprep.subr.bf16.mxu0 %v572
      %617 = vmatpush1.bf16.msra.mxu0 %v571
      %618 = vmatprep.subr.bf16.mxu0 %v574
      %619 = vmatpush1.bf16.msra.mxu0 %v573
      %620 = vmatprep.subr.bf16.mxu0 %v576
      %621 = vmatpush1.bf16.msra.mxu0 %v575
      %622 = vmatprep.subr.bf16.mxu0 %v578
      %623 = vmatpush1.bf16.msra.mxu0 %v577
      %624 = vmatprep.subr.bf16.mxu0 %v580
      %625 = vmatpush1.bf16.msra.mxu0 %v579
      %626 = vmatprep.subr.bf16.mxu0 %v582
      %627 = vmatpush1.bf16.msra.mxu0 %v581
      %628 = vmatprep.subr.bf16.mxu0 %v584
      %629 = vmatpush1.bf16.msra.mxu0 %v583
      %630 = vmatprep.subr.bf16.mxu0 %v586
      %631 = vmatpush1.bf16.msra.mxu0 %v585
      %632 = vmatprep.subr.bf16.mxu0 %v588
      %633 = vmatpush1.bf16.msra.mxu0 %v587
      %634 = vmatprep.subr.bf16.mxu0 %v590
      %635 = vmatpush1.bf16.msra.mxu0 %v589
      %636 = vmatprep.subr.bf16.mxu0 %v592
      %637 = vmatpush1.bf16.msra.mxu0 %v591
      %638 = vmatprep.mubr.bf16.mxu0 %v603
      %639 = vmatmul.mubr.bf16.gmra.mrb[0].mxu0 %v602
      %v640 = vpop.f32.mrb[0].mxu0
      %v641 = vadd.f32 %v597, %v640
      %v642 = vpop.f32.mrb[0].mxu0
      %v643 = vadd.f32 %v597, %v642
      %v644 = vpop.f32.mrb[0].mxu0
      %v645 = vpop.f32.mrb[0].mxu0
      %646 = vdwg.mxu0
      %v647 = vsub.f32 0.0, %v641
      %v648 = vsub.f32 0.0, %v643
      %v649 = vmul.f32 %v647, 1.442695
      %v650 = vpow.pop %v649
      %v651 = vmul.f32 %v648, 1.442695
      %v652 = vpow.pop %v651
      %v653 = vadd.f32 %v650, 1.0
      %v654 = vadd.f32 %v652, 1.0
      %v655 = vrcp.pop %v653
      %v656 = vmul.f32 %v641, %v655
      %v657 = vrcp.pop %v654
      %v658 = vmul.f32 %v643, %v657
      %v659 = vld [vmem:[%s3] sm:$0xff]
      %v660 = vld [vmem:[%s3 + $0x8] sm:$0xff]
      %v661 = vmul.f32 %v656, %v659
      %v662 = vmul.f32 %v658, %v660
      %v663 = vpack.c.bf16 %v661, %v661
      %v664 = vpack.c.bf16 %v662, %v662
      %667 = vrot.lane.b32.xlu0 %v663, 19
      %v668 = vpop.permute.xlu0 %667
      %669 = vrot.lane.b32.xlu0 %v664, 19
      %v670 = vpop.permute.xlu0 %669
      %vm671 = vcmask 154624
      %v672 = vsel %vm671, %v668, %v670
      %vm673 = vcmask 154624
      %v676 = vsel %vm673, 0, %v668
      %vm677 = vcmask 89088
      %v679 = vsel %vm677, %v670, 0
      %v680 = vrot.slane %v663, 1
      %v681 = vrot.slane %v664, 1
      %682 = vrot.lane.b32.xlu0 %v680, 20
      %v683 = vpop.permute.xlu0 %682
      %684 = vrot.lane.b32.xlu0 %v681, 20
      %v685 = vpop.permute.xlu0 %684
      %vm686 = vcmask 162816
      %v687 = vsel %vm686, %v683, %v685
      %vm688 = vcmask 162816
      %v690 = vsel %vm688, 0, %v683
      %vm691 = vcmask 97280
      %v693 = vsel %vm691, %v685, 0
      %v694 = vrot.slane %v663, 2
      %v695 = vrot.slane %v664, 2
      %696 = vrot.lane.b32.xlu0 %v694, 37
      %v697 = vpop.permute.xlu0 %696
      %698 = vrot.lane.b32.xlu0 %v695, 37
      %v699 = vpop.permute.xlu0 %698
      %vm700 = vcmask 302080
      %v701 = vsel %vm700, %v697, %v699
      %vm702 = vcmask 302080
      %v704 = vsel %vm702, 0, %v697
      %vm705 = vcmask 236544
      %v707 = vsel %vm705, %v699, 0
      %v708 = vrot.slane %v663, 3
      %v709 = vrot.slane %v664, 3
      %710 = vrot.lane.b32.xlu0 %v708, 38
      %v711 = vpop.permute.xlu0 %710
      %712 = vrot.lane.b32.xlu0 %v709, 38
      %v713 = vpop.permute.xlu0 %712
      %vm714 = vcmask 310272
      %v715 = vsel %vm714, %v711, %v713
      %vm716 = vcmask 310272
      %v718 = vsel %vm716, 0, %v711
      %vm719 = vcmask 244736
      %v721 = vsel %vm719, %v713, 0
      %v724 = vrot.slane %v690, 7
      %v725 = vrot.slane %v687, 7
      %v726 = vrot.slane %v693, 7
      %v729 = vrot.slane %v704, 6
      %v730 = vrot.slane %v701, 6
      %v731 = vrot.slane %v707, 6
      %v734 = vrot.slane %v718, 5
      %v735 = vrot.slane %v715, 5
      %v736 = vrot.slane %v721, 5
      %vm737 = vcmask 1040384
      %v739 = vsel %vm737, %v676, %v724
      %v742 = vsel %vm737, %v672, %v725
      %v744 = vsel %vm737, %v679, %v726
      %vm745 = vcmask 1041408
      %v747 = vsel %vm745, %v739, %v729
      %v749 = vsel %vm745, %v742, %v730
      %v751 = vsel %vm745, %v744, %v731
      %vm752 = vcmask 1042432
      %v754 = vsel %vm752, %v747, %v734
      %v757 = vsel %vm752, %v749, %v735
      %v760 = vsel %vm752, %v751, %v736
      %761 = vst [vmem:[#allocation3] sm:$0xf] %v754
      %vm762 = vcmask 977920
      %763 = vst.msk [vmem:[#allocation3 + $0x8] sm:$0xf] %vm762, %v757
      %v766 = vrot.slane %v754, 4
      %v767 = vrot.slane %v757, 4
      %768 = vrot.lane.b32.xlu0 %v766, 127
      %v769 = vpop.permute.xlu0 %768
      %770 = vrot.lane.b32.xlu0 %v767, 127
      %v771 = vpop.permute.xlu0 %770
      %vm772 = vcmask 1039360
      %v773 = vsel %vm772, %v769, %v771
      %776 = vst [vmem:[#allocation3] sm:$0xf0] %v773
      %vm777 = vcmask 982020
      %778 = vst.msk [vmem:[#allocation3 + $0x8] sm:$0xf0] %vm777, %v771
      %779 = vrot.lane.b32.xlu0 %v754, 126
      %v780 = vpop.permute.xlu0 %779
      %781 = vrot.lane.b32.xlu0 %v757, 126
      %v782 = vpop.permute.xlu0 %781
      %vm783 = vcmask 1031168
      %v784 = vsel %vm783, %v780, %v782
      %787 = vst [vmem:[#allocation3 + $0x10] sm:$0xf] %v784
      %788 = vst.msk [vmem:[#allocation3 + $0x18] sm:$0xf] %vm762, %v782
      %789 = vrot.lane.b32.xlu0 %v766, 125
      %v790 = vpop.permute.xlu0 %789
      %791 = vrot.lane.b32.xlu0 %v767, 125
      %v792 = vpop.permute.xlu0 %791
      %vm793 = vcmask 1022976
      %v794 = vsel %vm793, %v790, %v792
      %797 = vst [vmem:[#allocation3 + $0x10] sm:$0xf0] %v794
      %798 = vst.msk [vmem:[#allocation3 + $0x18] sm:$0xf0] %vm777, %v792
      %800 = vrot.lane.b32.xlu0 %v754, 110
      %v801 = vpop.permute.xlu0 %800
      %802 = vrot.lane.b32.xlu0 %v757, 110
      %v803 = vpop.permute.xlu0 %802
      %804 = vrot.lane.b32.xlu0 %v760, 110
      %v805 = vpop.permute.xlu0 %804
      %vm806 = vcmask 900096
      %v807 = vsel %vm806, %v801, %v803
      %v808 = vsel %vm806, %v803, %v805
      %811 = vst [vmem:[#allocation3 + $0x20] sm:$0xf] %v807
      %812 = vst.msk [vmem:[#allocation3 + $0x28] sm:$0xf] %vm762, %v808
      %v813 = vrot.slane %v760, 4
      %814 = vrot.lane.b32.xlu0 %v766, 109
      %v815 = vpop.permute.xlu0 %814
      %816 = vrot.lane.b32.xlu0 %v767, 109
      %v817 = vpop.permute.xlu0 %816
      %818 = vrot.lane.b32.xlu0 %v813, 109
      %v819 = vpop.permute.xlu0 %818
      %v820 = vsel %vm357, %v815, %v817
      %v821 = vsel %vm357, %v817, %v819
      %824 = vst [vmem:[#allocation3 + $0x20] sm:$0xf0] %v820
      %825 = vst.msk [vmem:[#allocation3 + $0x28] sm:$0xf0] %vm777, %v821
      %826 = vrot.lane.b32.xlu0 %v754, 108
      %v827 = vpop.permute.xlu0 %826
      %828 = vrot.lane.b32.xlu0 %v757, 108
      %v829 = vpop.permute.xlu0 %828
      %830 = vrot.lane.b32.xlu0 %v760, 108
      %v831 = vpop.permute.xlu0 %830
      %v832 = vsel %vm371, %v827, %v829
      %v833 = vsel %vm371, %v829, %v831
      %836 = vst [vmem:[#allocation3 + $0x30] sm:$0xf] %v832
      %837 = vst.msk [vmem:[#allocation3 + $0x38] sm:$0xf] %vm762, %v833
      %838 = vrot.lane.b32.xlu0 %v766, 107
      %v839 = vpop.permute.xlu0 %838
      %840 = vrot.lane.b32.xlu0 %v767, 107
      %v841 = vpop.permute.xlu0 %840
      %842 = vrot.lane.b32.xlu0 %v813, 107
      %v843 = vpop.permute.xlu0 %842
      %v844 = vsel %vm384, %v839, %v841
      %v845 = vsel %vm384, %v841, %v843
      %848 = vst [vmem:[#allocation3 + $0x30] sm:$0xf0] %v844
      %849 = vst.msk [vmem:[#allocation3 + $0x38] sm:$0xf0] %vm777, %v845
      %850 = vrot.lane.b32.xlu0 %v754, 92
      %v851 = vpop.permute.xlu0 %850
      %852 = vrot.lane.b32.xlu0 %v757, 92
      %v853 = vpop.permute.xlu0 %852
      %854 = vrot.lane.b32.xlu0 %v760, 92
      %v855 = vpop.permute.xlu0 %854
      %vm856 = vcmask 752640
      %v857 = vsel %vm856, %v851, %v853
      %v858 = vsel %vm856, %v853, %v855
      %861 = vst [vmem:[#allocation3 + $0x40] sm:$0xf] %v857
      %862 = vst.msk [vmem:[#allocation3 + $0x48] sm:$0xf] %vm762, %v858
      %863 = vrot.lane.b32.xlu0 %v766, 91
      %v864 = vpop.permute.xlu0 %863
      %865 = vrot.lane.b32.xlu0 %v767, 91
      %v866 = vpop.permute.xlu0 %865
      %867 = vrot.lane.b32.xlu0 %v813, 91
      %v868 = vpop.permute.xlu0 %867
      %v869 = vsel %vm410, %v864, %v866
      %v870 = vsel %vm410, %v866, %v868
      %873 = vst [vmem:[#allocation3 + $0x40] sm:$0xf0] %v869
      %874 = vst.msk [vmem:[#allocation3 + $0x48] sm:$0xf0] %vm777, %v870
      %875 = vrot.lane.b32.xlu0 %v754, 90
      %v876 = vpop.permute.xlu0 %875
      %877 = vrot.lane.b32.xlu0 %v757, 90
      %v878 = vpop.permute.xlu0 %877
      %879 = vrot.lane.b32.xlu0 %v760, 90
      %v880 = vpop.permute.xlu0 %879
      %v881 = vsel %vm423, %v876, %v878
      %v882 = vsel %vm423, %v878, %v880
      %885 = vst [vmem:[#allocation3 + $0x50] sm:$0xf] %v881
      %886 = vst.msk [vmem:[#allocation3 + $0x58] sm:$0xf] %vm762, %v882
      %887 = vrot.lane.b32.xlu0 %v766, 89
      %v888 = vpop.permute.xlu0 %887
      %889 = vrot.lane.b32.xlu0 %v767, 89
      %v890 = vpop.permute.xlu0 %889
      %891 = vrot.lane.b32.xlu0 %v813, 89
      %v892 = vpop.permute.xlu0 %891
      %v893 = vsel %vm436, %v888, %v890
      %v894 = vsel %vm436, %v890, %v892
      %897 = vst [vmem:[#allocation3 + $0x50] sm:$0xf0] %v893
      %898 = vst.msk [vmem:[#allocation3 + $0x58] sm:$0xf0] %vm777, %v894
      %899 = vrot.lane.b32.xlu0 %v754, 74
      %v900 = vpop.permute.xlu0 %899
      %901 = vrot.lane.b32.xlu0 %v757, 74
      %v902 = vpop.permute.xlu0 %901
      %903 = vrot.lane.b32.xlu0 %v760, 74
      %v904 = vpop.permute.xlu0 %903
      %vm905 = vcmask 605184
      %v906 = vsel %vm905, %v900, %v902
      %v907 = vsel %vm905, %v902, %v904
      %910 = vst [vmem:[#allocation3 + $0x60] sm:$0xf] %v906
      %911 = vst.msk [vmem:[#allocation3 + $0x68] sm:$0xf] %vm762, %v907
      %912 = vrot.lane.b32.xlu0 %v766, 73
      %v913 = vpop.permute.xlu0 %912
      %914 = vrot.lane.b32.xlu0 %v767, 73
      %v915 = vpop.permute.xlu0 %914
      %916 = vrot.lane.b32.xlu0 %v813, 73
      %v917 = vpop.permute.xlu0 %916
      %v918 = vsel %vm462, %v913, %v915
      %v919 = vsel %vm462, %v915, %v917
      %922 = vst [vmem:[#allocation3 + $0x60] sm:$0xf0] %v918
      %923 = vst.msk [vmem:[#allocation3 + $0x68] sm:$0xf0] %vm777, %v919
      %924 = vrot.lane.b32.xlu0 %v754, 72
      %v925 = vpop.permute.xlu0 %924
      %926 = vrot.lane.b32.xlu0 %v757, 72
      %v927 = vpop.permute.xlu0 %926
      %928 = vrot.lane.b32.xlu0 %v760, 72
      %v929 = vpop.permute.xlu0 %928
      %v930 = vsel %vm475, %v925, %v927
      %v931 = vsel %vm475, %v927, %v929
      %934 = vst [vmem:[#allocation3 + $0x70] sm:$0xf] %v930
      %935 = vst.msk [vmem:[#allocation3 + $0x78] sm:$0xf] %vm762, %v931
      %936 = vrot.lane.b32.xlu0 %v766, 71
      %v937 = vpop.permute.xlu0 %936
      %938 = vrot.lane.b32.xlu0 %v767, 71
      %v939 = vpop.permute.xlu0 %938
      %940 = vrot.lane.b32.xlu0 %v813, 71
      %v941 = vpop.permute.xlu0 %940
      %v942 = vsel %vm488, %v937, %v939
      %v943 = vsel %vm488, %v939, %v941
      %946 = vst [vmem:[#allocation3 + $0x70] sm:$0xf0] %v942
      %947 = vst.msk [vmem:[#allocation3 + $0x78] sm:$0xf0] %vm777, %v943
      %v948 = vld [vmem:[%s4] sm:$0xf]
      %v949 = vld [vmem:[%s4 + $0x4] sm:$0xf]
      %v950 = vld [vmem:[#allocation3] sm:$0xff]
      %v951 = vld [vmem:[#allocation3 + $0x8] sm:$0xff]
      %v952 = vld [vmem:[#allocation3 + $0x10] sm:$0xff]
      %v953 = vld [vmem:[#allocation3 + $0x18] sm:$0xff]
      %v954 = vld [vmem:[#allocation3 + $0x20] sm:$0xff]
      %v955 = vld [vmem:[#allocation3 + $0x28] sm:$0xff]
      %v956 = vld [vmem:[#allocation3 + $0x30] sm:$0xff]
      %v957 = vld [vmem:[#allocation3 + $0x38] sm:$0xff]
      %v958 = vld [vmem:[#allocation3 + $0x40] sm:$0xff]
      %v959 = vld [vmem:[#allocation3 + $0x48] sm:$0xff]
      %v960 = vld [vmem:[#allocation3 + $0x50] sm:$0xff]
      %v961 = vld [vmem:[#allocation3 + $0x58] sm:$0xff]
      %v962 = vld [vmem:[#allocation3 + $0x60] sm:$0xff]
      %v963 = vld [vmem:[#allocation3 + $0x68] sm:$0xff]
      %v964 = vld [vmem:[#allocation3 + $0x70] sm:$0xff]
      %v965 = vld [vmem:[#allocation3 + $0x78] sm:$0xff]
      %v966 = vld [vmem:[%s5] sm:$0xff]
      %v967 = vld [vmem:[%s5 + $0x8] sm:$0xff]
      %969 = vset.pattern.permute.xlu0 0
      %970 = vperm.xlu0 %969, %v966
      %v971 = vpop.permute.xlu0 %970
      %974 = vset.pattern.permute.xlu0 0
      %975 = vperm.xlu0 %974, %v967
      %v976 = vpop.permute.xlu0 %975
      %v980 = vunpack.c.l.b16 %v948
      %v981 = vunpack.c.l.b16 %v949
      %v982 = vpack.c.b16 %v981, %v980
      %984 = vmatprep.subr.bf16.mxu0 %v951
      %985 = vmatpush1.bf16.msra.mxu0 %v950
      %986 = vmatprep.subr.bf16.mxu0 %v953
      %987 = vmatpush1.bf16.msra.mxu0 %v952
      %988 = vmatprep.subr.bf16.mxu0 %v955
      %989 = vmatpush1.bf16.msra.mxu0 %v954
      %990 = vmatprep.subr.bf16.mxu0 %v957
      %991 = vmatpush1.bf16.msra.mxu0 %v956
      %992 = vmatprep.subr.bf16.mxu0 %v959
      %993 = vmatpush1.bf16.msra.mxu0 %v958
      %994 = vmatprep.subr.bf16.mxu0 %v961
      %995 = vmatpush1.bf16.msra.mxu0 %v960
      %996 = vmatprep.subr.bf16.mxu0 %v963
      %997 = vmatpush1.bf16.msra.mxu0 %v962
      %998 = vmatprep.subr.bf16.mxu0 %v965
      %999 = vmatpush1.bf16.msra.mxu0 %v964
      %1000 = vmatprep.subr.bf16.mxu0 0
      %1001 = vmatpush1.bf16.msra.mxu0 0
      %1002 = vmatprep.subr.bf16.mxu0 0
      %1003 = vmatpush1.bf16.msra.mxu0 0
      %1004 = vmatprep.subr.bf16.mxu0 0
      %1005 = vmatpush1.bf16.msra.mxu0 0
      %1006 = vmatprep.subr.bf16.mxu0 0
      %1007 = vmatpush1.bf16.msra.mxu0 0
      %1008 = vmatprep.subr.bf16.mxu0 0
      %1009 = vmatpush1.bf16.msra.mxu0 0
      %1010 = vmatprep.subr.bf16.mxu0 0
      %1011 = vmatpush1.bf16.msra.mxu0 0
      %1012 = vmatprep.subr.bf16.mxu0 0
      %1013 = vmatpush1.bf16.msra.mxu0 0
      %1014 = vmatprep.subr.bf16.mxu0 0
      %1015 = vmatpush1.bf16.msra.mxu0 0
      %1016 = vmatprep.mubr.bf16.mxu0 0
      %1017 = vmatmul.mubr.bf16.gmra.mrb[0].mxu0 %v982
      %v1018 = vpop.f32.mrb[0].mxu0
      %v1019 = vadd.f32 %v971, %v1018
      %v1020 = vpop.f32.mrb[0].mxu0
      %v1021 = vadd.f32 %v971, %v1020
      %v1022 = vpop.f32.mrb[0].mxu0
      %v1023 = vadd.f32 %v976, %v1022
      %v1024 = vpop.f32.mrb[0].mxu0
      %v1025 = vadd.f32 %v976, %v1024
      %1026 = vdwg.mxu0
      %v1027 = vsub.f32 0.0, %v1019
      %v1028 = vsub.f32 0.0, %v1021
      %v1029 = vsub.f32 0.0, %v1023
      %v1030 = vsub.f32 0.0, %v1025
      %v1031 = vmul.f32 %v1027, 1.442695
      %v1032 = vpow.pop %v1031
      %v1033 = vmul.f32 %v1028, 1.442695
      %v1034 = vpow.pop %v1033
      %v1035 = vmul.f32 %v1029, 1.442695
      %v1036 = vpow.pop %v1035
      %v1037 = vmul.f32 %v1030, 1.442695
      %v1038 = vpow.pop %v1037
      %v1039 = vadd.f32 %v1032, 1.0
      %v1040 = vadd.f32 %v1034, 1.0
      %v1041 = vadd.f32 %v1036, 1.0
      %v1042 = vadd.f32 %v1038, 1.0
      %v1043 = vrcp.pop %v1039
      %v1044 = vmul.f32 %v1019, %v1043
      %v1045 = vrcp.pop %v1040
      %v1046 = vmul.f32 %v1021, %v1045
      %v1047 = vrcp.pop %v1041
      %v1048 = vmul.f32 %v1023, %v1047
      %v1049 = vrcp.pop %v1042
      %v1050 = vmul.f32 %v1025, %v1049
      %v1051 = vpack.c.bf16 %v1048, %v1044
      %v1052 = vpack.c.bf16 %v1050, %v1046
      %v1053 = vld [vmem:[%s6] sm:$0xff]
      %v1054 = vld [vmem:[%s6 + $0x8] sm:$0xff]
      %v1055 = vld [vmem:[%s6 + $0x10] sm:$0xff]
      %v1056 = vld [vmem:[%s6 + $0x18] sm:$0xff]
      %v1057 = vld [vmem:[%s6 + $0x20] sm:$0xff]
      %v1058 = vld [vmem:[%s6 + $0x28] sm:$0xff]
      %v1059 = vld [vmem:[%s6 + $0x30] sm:$0xff]
      %v1060 = vld [vmem:[%s6 + $0x38] sm:$0xff]
      %v1061 = vld [vmem:[%s6 + $0x40] sm:$0xff]
      %v1062 = vld [vmem:[%s6 + $0x48] sm:$0xff]
      %v1063 = vld [vmem:[%s6 + $0x50] sm:$0xff]
      %v1064 = vld [vmem:[%s6 + $0x58] sm:$0xff]
      %v1065 = vld [vmem:[%s6 + $0x60] sm:$0xff]
      %v1066 = vld [vmem:[%s6 + $0x68] sm:$0xff]
      %v1067 = vld [vmem:[%s6 + $0x70] sm:$0xff]
      %v1068 = vld [vmem:[%s6 + $0x78] sm:$0xff]
      %v1069 = vld [vmem:[%s6 + $0x80] sm:$0xff]
      %v1070 = vld [vmem:[%s6 + $0x88] sm:$0xff]
      %v1071 = vld [vmem:[%s6 + $0x90] sm:$0xff]
      %v1072 = vld [vmem:[%s6 + $0x98] sm:$0xff]
      %v1073 = vld [vmem:[%s6 + $0xa0] sm:$0xff]
      %v1074 = vld [vmem:[%s6 + $0xa8] sm:$0xff]
      %v1075 = vld [vmem:[%s6 + $0xb0] sm:$0xff]
      %v1076 = vld [vmem:[%s6 + $0xb8] sm:$0xff]
      %v1077 = vld [vmem:[%s6 + $0xc0] sm:$0xff]
      %v1078 = vld [vmem:[%s6 + $0xc8] sm:$0xff]
      %v1079 = vld [vmem:[%s6 + $0xd0] sm:$0xff]
      %v1080 = vld [vmem:[%s6 + $0xd8] sm:$0xff]
      %v1081 = vld [vmem:[%s6 + $0xe0] sm:$0xff]
      %v1082 = vld [vmem:[%s6 + $0xe8] sm:$0xff]
      %v1083 = vld [vmem:[%s6 + $0xf0] sm:$0xff]
      %v1084 = vld [vmem:[%s6 + $0xf8] sm:$0xff]
      %v1085 = vld [vmem:[%s6 + $0x100] sm:$0xff]
      %v1086 = vld [vmem:[%s6 + $0x108] sm:$0xff]
      %v1087 = vld [vmem:[%s6 + $0x110] sm:$0xff]
      %v1088 = vld [vmem:[%s6 + $0x118] sm:$0xff]
      %v1089 = vld [vmem:[%s6 + $0x120] sm:$0xff]
      %v1090 = vld [vmem:[%s6 + $0x128] sm:$0xff]
      %v1091 = vld [vmem:[%s6 + $0x130] sm:$0xff]
      %v1092 = vld [vmem:[%s6 + $0x138] sm:$0xff]
      %v1093 = vld [vmem:[%s6 + $0x140] sm:$0xff]
      %v1094 = vld [vmem:[%s6 + $0x148] sm:$0xff]
      %v1095 = vld [vmem:[%s6 + $0x150] sm:$0xff]
      %v1096 = vld [vmem:[%s6 + $0x158] sm:$0xff]
      %v1097 = vld [vmem:[%s6 + $0x160] sm:$0xff]
      %v1098 = vld [vmem:[%s6 + $0x168] sm:$0xff]
      %v1099 = vld [vmem:[%s6 + $0x170] sm:$0xff]
      %v1100 = vld [vmem:[%s6 + $0x178] sm:$0xff]
      %v1101 = vld [vmem:[%s6 + $0x180] sm:$0xff]
      %v1102 = vld [vmem:[%s6 + $0x188] sm:$0xff]
      %v1103 = vld [vmem:[%s6 + $0x190] sm:$0xff]
      %v1104 = vld [vmem:[%s6 + $0x198] sm:$0xff]
      %v1105 = vld [vmem:[%s6 + $0x1a0] sm:$0xff]
      %v1106 = vld [vmem:[%s6 + $0x1a8] sm:$0xff]
      %v1107 = vld [vmem:[%s6 + $0x1b0] sm:$0xff]
      %v1108 = vld [vmem:[%s6 + $0x1b8] sm:$0xff]
      %v1109 = vld [vmem:[%s6 + $0x1c0] sm:$0xff]
      %v1110 = vld [vmem:[%s6 + $0x1c8] sm:$0xff]
      %v1111 = vld [vmem:[%s6 + $0x1d0] sm:$0xff]
      %v1112 = vld [vmem:[%s6 + $0x1d8] sm:$0xff]
      %v1113 = vld [vmem:[%s6 + $0x1e0] sm:$0xff]
      %v1114 = vld [vmem:[%s6 + $0x1e8] sm:$0xff]
      %v1177 = vunpack.c.l.b16 %v1053
      %v1178 = vunpack.c.h.b16 %v1053
      %v1179 = vunpack.c.l.b16 %v1054
      %v1180 = vunpack.c.h.b16 %v1054
      %v1181 = vunpack.c.l.b16 %v1055
      %v1182 = vunpack.c.h.b16 %v1055
      %v1183 = vunpack.c.l.b16 %v1056
      %v1184 = vunpack.c.h.b16 %v1056
      %v1185 = vunpack.c.l.b16 %v1057
      %v1186 = vunpack.c.h.b16 %v1057
      %v1187 = vunpack.c.l.b16 %v1058
      %v1188 = vunpack.c.h.b16 %v1058
      %v1189 = vunpack.c.l.b16 %v1059
      %v1190 = vunpack.c.h.b16 %v1059
      %v1191 = vunpack.c.l.b16 %v1060
      %v1192 = vunpack.c.h.b16 %v1060
      %v1193 = vunpack.c.l.b16 %v1061
      %v1194 = vunpack.c.h.b16 %v1061
      %v1195 = vunpack.c.l.b16 %v1062
      %v1196 = vunpack.c.h.b16 %v1062
      %v1197 = vunpack.c.l.b16 %v1063
      %v1198 = vunpack.c.h.b16 %v1063
      %v1199 = vunpack.c.l.b16 %v1064
      %v1200 = vunpack.c.h.b16 %v1064
      %v1201 = vunpack.c.l.b16 %v1065
      %v1202 = vunpack.c.h.b16 %v1065
      %v1203 = vunpack.c.l.b16 %v1066
      %v1204 = vunpack.c.h.b16 %v1066
      %v1205 = vunpack.c.l.b16 %v1067
      %v1206 = vunpack.c.h.b16 %v1067
      %v1207 = vunpack.c.l.b16 %v1068
      %v1208 = vunpack.c.h.b16 %v1068
      %v1209 = vunpack.c.l.b16 %v1069
      %v1210 = vunpack.c.h.b16 %v1069
      %v1211 = vunpack.c.l.b16 %v1070
      %v1212 = vunpack.c.h.b16 %v1070
      %v1213 = vunpack.c.l.b16 %v1071
      %v1214 = vunpack.c.h.b16 %v1071
      %v1215 = vunpack.c.l.b16 %v1072
      %v1216 = vunpack.c.h.b16 %v1072
      %v1217 = vunpack.c.l.b16 %v1073
      %v1218 = vunpack.c.h.b16 %v1073
      %v1219 = vunpack.c.l.b16 %v1074
      %v1220 = vunpack.c.h.b16 %v1074
      %v1221 = vunpack.c.l.b16 %v1075
      %v1222 = vunpack.c.h.b16 %v1075
      %v1223 = vunpack.c.l.b16 %v1076
      %v1224 = vunpack.c.h.b16 %v1076
      %v1225 = vunpack.c.l.b16 %v1077
      %v1226 = vunpack.c.h.b16 %v1077
      %v1227 = vunpack.c.l.b16 %v1078
      %v1228 = vunpack.c.h.b16 %v1078
      %v1229 = vunpack.c.l.b16 %v1079
      %v1230 = vunpack.c.h.b16 %v1079
      %v1231 = vunpack.c.l.b16 %v1080
      %v1232 = vunpack.c.h.b16 %v1080
      %v1233 = vunpack.c.l.b16 %v1081
      %v1234 = vunpack.c.h.b16 %v1081
      %v1235 = vunpack.c.l.b16 %v1082
      %v1236 = vunpack.c.h.b16 %v1082
      %v1237 = vunpack.c.l.b16 %v1083
      %v1238 = vunpack.c.h.b16 %v1083
      %v1239 = vunpack.c.l.b16 %v1084
      %v1240 = vunpack.c.h.b16 %v1084
      %v1241 = vunpack.c.l.b16 %v1085
      %v1242 = vunpack.c.h.b16 %v1085
      %v1243 = vunpack.c.l.b16 %v1086
      %v1244 = vunpack.c.h.b16 %v1086
      %v1245 = vunpack.c.l.b16 %v1087
      %v1246 = vunpack.c.h.b16 %v1087
      %v1247 = vunpack.c.l.b16 %v1088
      %v1248 = vunpack.c.h.b16 %v1088
      %v1249 = vunpack.c.l.b16 %v1089
      %v1250 = vunpack.c.h.b16 %v1089
      %v1251 = vunpack.c.l.b16 %v1090
      %v1252 = vunpack.c.h.b16 %v1090
      %v1253 = vunpack.c.l.b16 %v1091
      %v1254 = vunpack.c.h.b16 %v1091
      %v1255 = vunpack.c.l.b16 %v1092
      %v1256 = vunpack.c.h.b16 %v1092
      %v1257 = vunpack.c.l.b16 %v1093
      %v1258 = vunpack.c.h.b16 %v1093
      %v1259 = vunpack.c.l.b16 %v1094
      %v1260 = vunpack.c.h.b16 %v1094
      %v1261 = vunpack.c.l.b16 %v1095
      %v1262 = vunpack.c.h.b16 %v1095
      %v1263 = vunpack.c.l.b16 %v1096
      %v1264 = vunpack.c.h.b16 %v1096
      %v1265 = vunpack.c.l.b16 %v1097
      %v1266 = vunpack.c.h.b16 %v1097
      %v1267 = vunpack.c.l.b16 %v1098
      %v1268 = vunpack.c.h.b16 %v1098
      %v1269 = vunpack.c.l.b16 %v1099
      %v1270 = vunpack.c.h.b16 %v1099
      %v1271 = vunpack.c.l.b16 %v1100
      %v1272 = vunpack.c.h.b16 %v1100
      %v1273 = vunpack.c.l.b16 %v1101
      %v1274 = vunpack.c.h.b16 %v1101
      %v1275 = vunpack.c.l.b16 %v1102
      %v1276 = vunpack.c.h.b16 %v1102
      %v1277 = vunpack.c.l.b16 %v1103
      %v1278 = vunpack.c.h.b16 %v1103
      %v1279 = vunpack.c.l.b16 %v1104
      %v1280 = vunpack.c.h.b16 %v1104
      %v1281 = vunpack.c.l.b16 %v1105
      %v1282 = vunpack.c.h.b16 %v1105
      %v1283 = vunpack.c.l.b16 %v1106
      %v1284 = vunpack.c.h.b16 %v1106
      %v1285 = vunpack.c.l.b16 %v1107
      %v1286 = vunpack.c.h.b16 %v1107
      %v1287 = vunpack.c.l.b16 %v1108
      %v1288 = vunpack.c.h.b16 %v1108
      %v1289 = vunpack.c.l.b16 %v1109
      %v1290 = vunpack.c.h.b16 %v1109
      %v1291 = vunpack.c.l.b16 %v1110
      %v1292 = vunpack.c.h.b16 %v1110
      %v1293 = vunpack.c.l.b16 %v1111
      %v1294 = vunpack.c.h.b16 %v1111
      %v1295 = vunpack.c.l.b16 %v1112
      %v1296 = vunpack.c.h.b16 %v1112
      %v1297 = vunpack.c.l.b16 %v1113
      %v1298 = vunpack.c.h.b16 %v1113
      %v1299 = vunpack.c.l.b16 %v1114
      %v1300 = vunpack.c.h.b16 %v1114
      %v1301 = vpack.c.b16 %v1181, %v1177
      %v1302 = vpack.c.b16 %v1182, %v1178
      %v1303 = vpack.c.b16 %v1183, %v1179
      %v1304 = vpack.c.b16 %v1184, %v1180
      %v1305 = vpack.c.b16 %v1189, %v1185
      %v1306 = vpack.c.b16 %v1190, %v1186
      %v1307 = vpack.c.b16 %v1191, %v1187
      %v1308 = vpack.c.b16 %v1192, %v1188
      %v1309 = vpack.c.b16 %v1197, %v1193
      %v1310 = vpack.c.b16 %v1198, %v1194
      %v1311 = vpack.c.b16 %v1199, %v1195
      %v1312 = vpack.c.b16 %v1200, %v1196
      %v1313 = vpack.c.b16 %v1205, %v1201
      %v1314 = vpack.c.b16 %v1206, %v1202
      %v1315 = vpack.c.b16 %v1207, %v1203
      %v1316 = vpack.c.b16 %v1208, %v1204
      %v1317 = vpack.c.b16 %v1213, %v1209
      %v1318 = vpack.c.b16 %v1214, %v1210
      %v1319 = vpack.c.b16 %v1215, %v1211
      %v1320 = vpack.c.b16 %v1216, %v1212
      %v1321 = vpack.c.b16 %v1221, %v1217
      %v1322 = vpack.c.b16 %v1222, %v1218
      %v1323 = vpack.c.b16 %v1223, %v1219
      %v1324 = vpack.c.b16 %v1224, %v1220
      %v1325 = vpack.c.b16 %v1229, %v1225
      %v1326 = vpack.c.b16 %v1230, %v1226
      %v1327 = vpack.c.b16 %v1231, %v1227
      %v1328 = vpack.c.b16 %v1232, %v1228
      %v1329 = vpack.c.b16 %v1237, %v1233
      %v1330 = vpack.c.b16 %v1238, %v1234
      %v1331 = vpack.c.b16 %v1239, %v1235
      %v1332 = vpack.c.b16 %v1240, %v1236
      %v1333 = vpack.c.b16 %v1245, %v1241
      %v1334 = vpack.c.b16 %v1246, %v1242
      %v1335 = vpack.c.b16 %v1247, %v1243
      %v1336 = vpack.c.b16 %v1248, %v1244
      %v1337 = vpack.c.b16 %v1253, %v1249
      %v1338 = vpack.c.b16 %v1254, %v1250
      %v1339 = vpack.c.b16 %v1255, %v1251
      %v1340 = vpack.c.b16 %v1256, %v1252
      %v1341 = vpack.c.b16 %v1261, %v1257
      %v1342 = vpack.c.b16 %v1262, %v1258
      %v1343 = vpack.c.b16 %v1263, %v1259
      %v1344 = vpack.c.b16 %v1264, %v1260
      %v1345 = vpack.c.b16 %v1269, %v1265
      %v1346 = vpack.c.b16 %v1270, %v1266
      %v1347 = vpack.c.b16 %v1271, %v1267
      %v1348 = vpack.c.b16 %v1272, %v1268
      %v1349 = vpack.c.b16 %v1277, %v1273
      %v1350 = vpack.c.b16 %v1278, %v1274
      %v1351 = vpack.c.b16 %v1279, %v1275
      %v1352 = vpack.c.b16 %v1280, %v1276
      %v1353 = vpack.c.b16 %v1285, %v1281
      %v1354 = vpack.c.b16 %v1286, %v1282
      %v1355 = vpack.c.b16 %v1287, %v1283
      %v1356 = vpack.c.b16 %v1288, %v1284
      %v1357 = vpack.c.b16 %v1293, %v1289
      %v1358 = vpack.c.b16 %v1294, %v1290
      %v1359 = vpack.c.b16 %v1295, %v1291
      %v1360 = vpack.c.b16 %v1296, %v1292
      %v1361 = vpack.c.b16 %v1297, %v1297
      %v1362 = vpack.c.b16 %v1298, %v1298
      %v1363 = vpack.c.b16 %v1299, %v1299
      %v1364 = vpack.c.b16 %v1300, %v1300
      %v1426 = vsel %vm363, %v1052, 0
      %vm1428 = vcmask 1043456
      %v1430 = vsel %vm1428, %v1361, 0
      %v1433 = vsel %vm1428, %v1362, 0
      %v1436 = vsel %vm1428, %v1363, 0
      %v1439 = vsel %vm1428, %v1364, 0
      %1441 = vmatprep.subr.bf16.mxu0 %v1302
      %1442 = vmatpush1.bf16.msra.mxu0 %v1301
      %1443 = vmatprep.subr.bf16.mxu0 %v1306
      %1444 = vmatpush1.bf16.msra.mxu0 %v1305
      %1445 = vmatprep.subr.bf16.mxu0 %v1310
      %1446 = vmatpush1.bf16.msra.mxu0 %v1309
      %1447 = vmatprep.subr.bf16.mxu0 %v1314
      %1448 = vmatpush1.bf16.msra.mxu0 %v1313
      %1449 = vmatprep.subr.bf16.mxu0 %v1318
      %1450 = vmatpush1.bf16.msra.mxu0 %v1317
      %1451 = vmatprep.subr.bf16.mxu0 %v1322
      %1452 = vmatpush1.bf16.msra.mxu0 %v1321
      %1453 = vmatprep.subr.bf16.mxu0 %v1326
      %1454 = vmatpush1.bf16.msra.mxu0 %v1325
      %1455 = vmatprep.subr.bf16.mxu0 %v1330
      %1456 = vmatpush1.bf16.msra.mxu0 %v1329
      %1457 = vmatprep.subr.bf16.mxu0 %v1334
      %1458 = vmatpush1.bf16.msra.mxu0 %v1333
      %1459 = vmatprep.subr.bf16.mxu0 %v1338
      %1460 = vmatpush1.bf16.msra.mxu0 %v1337
      %1461 = vmatprep.subr.bf16.mxu0 %v1342
      %1462 = vmatpush1.bf16.msra.mxu0 %v1341
      %1463 = vmatprep.subr.bf16.mxu0 %v1346
      %1464 = vmatpush1.bf16.msra.mxu0 %v1345
      %1465 = vmatprep.subr.bf16.mxu0 %v1350
      %1466 = vmatpush1.bf16.msra.mxu0 %v1349
      %1467 = vmatprep.subr.bf16.mxu0 %v1354
      %1468 = vmatpush1.bf16.msra.mxu0 %v1353
      %1469 = vmatprep.subr.bf16.mxu0 %v1358
      %1470 = vmatpush1.bf16.msra.mxu0 %v1357
      %1471 = vmatprep.subr.bf16.mxu0 %v1433
      %1472 = vmatpush1.bf16.msra.mxu0 %v1430
      %1473 = vmatprep.mubr.bf16.mxu0 %v1426
      %1474 = vmatmul.mubr.bf16.gmra.mrb[0].mxu0 %v1051
      %v1475 = vpop.f32.mrb[0].mxu0
      %v1476 = vadd.f32 0.0, %v1475
      %v1477 = vpop.f32.mrb[0].mxu0
      %v1478 = vadd.f32 0.0, %v1477
      %v1479 = vpop.f32.mrb[0].mxu0
      %v1480 = vadd.f32 0.0, %v1479
      %v1481 = vpop.f32.mrb[0].mxu0
      %v1482 = vadd.f32 0.0, %v1481
      %1483 = vdwg.mxu0
      %1484 = vmatprep.subr.bf16.mxu0 %v1304
      %1485 = vmatpush1.bf16.msra.mxu0 %v1303
      %1486 = vmatprep.subr.bf16.mxu0 %v1308
      %1487 = vmatpush1.bf16.msra.mxu0 %v1307
      %1488 = vmatprep.subr.bf16.mxu0 %v1312
      %1489 = vmatpush1.bf16.msra.mxu0 %v1311
      %1490 = vmatprep.subr.bf16.mxu0 %v1316
      %1491 = vmatpush1.bf16.msra.mxu0 %v1315
      %1492 = vmatprep.subr.bf16.mxu0 %v1320
      %1493 = vmatpush1.bf16.msra.mxu0 %v1319
      %1494 = vmatprep.subr.bf16.mxu0 %v1324
      %1495 = vmatpush1.bf16.msra.mxu0 %v1323
      %1496 = vmatprep.subr.bf16.mxu0 %v1328
      %1497 = vmatpush1.bf16.msra.mxu0 %v1327
      %1498 = vmatprep.subr.bf16.mxu0 %v1332
      %1499 = vmatpush1.bf16.msra.mxu0 %v1331
      %1500 = vmatprep.subr.bf16.mxu0 %v1336
      %1501 = vmatpush1.bf16.msra.mxu0 %v1335
      %1502 = vmatprep.subr.bf16.mxu0 %v1340
      %1503 = vmatpush1.bf16.msra.mxu0 %v1339
      %1504 = vmatprep.subr.bf16.mxu0 %v1344
      %1505 = vmatpush1.bf16.msra.mxu0 %v1343
      %1506 = vmatprep.subr.bf16.mxu0 %v1348
      %1507 = vmatpush1.bf16.msra.mxu0 %v1347
      %1508 = vmatprep.subr.bf16.mxu0 %v1352
      %1509 = vmatpush1.bf16.msra.mxu0 %v1351
      %1510 = vmatprep.subr.bf16.mxu0 %v1356
      %1511 = vmatpush1.bf16.msra.mxu0 %v1355
      %1512 = vmatprep.subr.bf16.mxu0 %v1360
      %1513 = vmatpush1.bf16.msra.mxu0 %v1359
      %1514 = vmatprep.subr.bf16.mxu0 %v1439
      %1515 = vmatpush1.bf16.msra.mxu0 %v1436
      %1516 = vmatprep.mubr.bf16.mxu0 %v1426
      %1517 = vmatmul.mubr.bf16.gmra.mrb[0].mxu0 %v1051
      %v1518 = vpop.f32.mrb[0].mxu0
      %v1519 = vadd.f32 0.0, %v1518
      %v1520 = vpop.f32.mrb[0].mxu0
      %v1521 = vadd.f32 0.0, %v1520
      %v1522 = vpop.f32.mrb[0].mxu0
      %v1523 = vadd.f32 0.0, %v1522
      %v1524 = vpop.f32.mrb[0].mxu0
      %v1525 = vadd.f32 0.0, %v1524
      %1526 = vdwg.mxu0
      %v1527 = vpack.c.bf16 %v1480, %v1476
      %v1528 = vpack.c.bf16 %v1482, %v1478
      %v1529 = vpack.c.bf16 %v1523, %v1519
      %v1530 = vpack.c.bf16 %v1525, %v1521
      %1532 = vrot.lane.b32.xlu0 %v1529, 72
      %v1533 = vpop.permute.xlu0 %1532
      %vm1535 = vcmask 572416
      %1536 = vst.msk [vmem:[#allocation4] sm:$0xff] %vm1535, %v1533
      %1538 = vrot.lane.b32.xlu0 %v1528, 48
      %v1539 = vpop.permute.xlu0 %1538
      %1540 = vrot.lane.b32.xlu0 %v1529, 48
      %v1541 = vpop.permute.xlu0 %1540
      %vm1542 = vcmask 392192
      %v1543 = vsel %vm1542, %v1539, %v1541
      %1545 = vst.msk [vmem:[#allocation4 + $0x8] sm:$0xff] %vm1535, %v1543
      %1546 = vrot.lane.b32.xlu0 %v1529, 71
      %v1547 = vpop.permute.xlu0 %1546
      %1549 = vst.msk [vmem:[#allocation4 + $0x10] sm:$0xff] %vm1535, %v1547
      %1550 = vrot.lane.b32.xlu0 %v1528, 47
      %v1551 = vpop.permute.xlu0 %1550
      %1552 = vrot.lane.b32.xlu0 %v1529, 47
      %v1553 = vpop.permute.xlu0 %1552
      %vm1554 = vcmask 384000
      %v1555 = vsel %vm1554, %v1551, %v1553
      %1557 = vst.msk [vmem:[#allocation4 + $0x18] sm:$0xff] %vm1535, %v1555
      %1558 = vrot.lane.b32.xlu0 %v1529, 70
      %v1559 = vpop.permute.xlu0 %1558
      %1561 = vst.msk [vmem:[#allocation4 + $0x20] sm:$0xff] %vm1535, %v1559
      %1562 = vrot.lane.b32.xlu0 %v1528, 46
      %v1563 = vpop.permute.xlu0 %1562
      %1564 = vrot.lane.b32.xlu0 %v1529, 46
      %v1565 = vpop.permute.xlu0 %1564
      %vm1566 = vcmask 375808
      %v1567 = vsel %vm1566, %v1563, %v1565
      %1569 = vst.msk [vmem:[#allocation4 + $0x28] sm:$0xff] %vm1535, %v1567
      %1571 = vrot.lane.b32.xlu0 %v1529, 69
      %v1572 = vpop.permute.xlu0 %1571
      %1573 = vrot.lane.b32.xlu0 %v1530, 69
      %v1574 = vpop.permute.xlu0 %1573
      %vm1575 = vcmask 564224
      %v1576 = vsel %vm1575, %v1572, %v1574
      %1578 = vst.msk [vmem:[#allocation4 + $0x30] sm:$0xff] %vm1535, %v1576
      %1580 = vrot.lane.b32.xlu0 %v1527, 24
      %v1581 = vpop.permute.xlu0 %1580
      %1582 = vrot.lane.b32.xlu0 %v1528, 24
      %v1583 = vpop.permute.xlu0 %1582
      %vm1584 = vcmask 195584
      %v1585 = vsel %vm1584, %v1581, %v1583
      %1587 = vst.msk [vmem:[#allocation4 + $0x38] sm:$0xff] %vm1535, %v1585
      %1588 = vst.msk [vmem:[#allocation4 + $0x40] sm:$0xff] %vm1535, %v1527
      %1589 = vrot.lane.b32.xlu0 %v1527, 23
      %v1590 = vpop.permute.xlu0 %1589
      %1591 = vrot.lane.b32.xlu0 %v1528, 23
      %v1592 = vpop.permute.xlu0 %1591
      %vm1593 = vcmask 187392
      %v1594 = vsel %vm1593, %v1590, %v1592
      %1596 = vst.msk [vmem:[#allocation4 + $0x48] sm:$0xff] %vm1535, %v1594
      %1597 = vrot.lane.b32.xlu0 %v1527, 127
      %v1598 = vpop.permute.xlu0 %1597
      %1600 = vst.msk [vmem:[#allocation4 + $0x50] sm:$0xff] %vm1535, %v1598
      %1601 = vrot.lane.b32.xlu0 %v1527, 22
      %v1602 = vpop.permute.xlu0 %1601
      %1603 = vrot.lane.b32.xlu0 %v1528, 22
      %v1604 = vpop.permute.xlu0 %1603
      %vm1605 = vcmask 179200
      %v1606 = vsel %vm1605, %v1602, %v1604
      %1608 = vst.msk [vmem:[#allocation4 + $0x58] sm:$0xff] %vm1535, %v1606
      %1609 = vrot.lane.b32.xlu0 %v1527, 126
      %v1610 = vpop.permute.xlu0 %1609
      %1612 = vst.msk [vmem:[#allocation4 + $0x60] sm:$0xff] %vm1535, %v1610
      %1613 = vrot.lane.b32.xlu0 %v1527, 21
      %v1614 = vpop.permute.xlu0 %1613
      %1615 = vrot.lane.b32.xlu0 %v1528, 21
      %v1616 = vpop.permute.xlu0 %1615
      %vm1617 = vcmask 171008
      %v1618 = vsel %vm1617, %v1614, %v1616
      %1620 = vst.msk [vmem:[#allocation4 + $0x68] sm:$0xff] %vm1535, %v1618
      %1621 = vrot.lane.b32.xlu0 %v1529, 62
      %v1622 = vpop.permute.xlu0 %1621
      %1623 = vrot.lane.b32.xlu0 %v1530, 62
      %v1624 = vpop.permute.xlu0 %1623
      %vm1625 = vcmask 506880
      %v1626 = vsel %vm1625, %v1622, %v1624
      %1628 = vst.msk [vmem:[#allocation4 + $0x70] sm:$0xff] %vm1535, %v1626
      %1629 = vrot.lane.b32.xlu0 %v1528, 38
      %v1630 = vpop.permute.xlu0 %1629
      %1631 = vrot.lane.b32.xlu0 %v1529, 38
      %v1632 = vpop.permute.xlu0 %1631
      %v1633 = vsel %vm714, %v1630, %v1632
      %1635 = vst.msk [vmem:[#allocation4 + $0x78] sm:$0xff] %vm1535, %v1633
      %1636 = vrot.lane.b32.xlu0 %v1529, 61
      %v1637 = vpop.permute.xlu0 %1636
      %1638 = vrot.lane.b32.xlu0 %v1530, 61
      %v1639 = vpop.permute.xlu0 %1638
      %vm1640 = vcmask 498688
      %v1641 = vsel %vm1640, %v1637, %v1639
      %1643 = vst.msk [vmem:[#allocation4 + $0x80] sm:$0xff] %vm1535, %v1641
      %1644 = vrot.lane.b32.xlu0 %v1528, 37
      %v1645 = vpop.permute.xlu0 %1644
      %1646 = vrot.lane.b32.xlu0 %v1529, 37
      %v1647 = vpop.permute.xlu0 %1646
      %v1648 = vsel %vm700, %v1645, %v1647
      %1650 = vst.msk [vmem:[#allocation4 + $0x88] sm:$0xff] %vm1535, %v1648
      %1651 = vrot.lane.b32.xlu0 %v1529, 60
      %v1652 = vpop.permute.xlu0 %1651
      %1653 = vrot.lane.b32.xlu0 %v1530, 60
      %v1654 = vpop.permute.xlu0 %1653
      %vm1655 = vcmask 490496
      %v1656 = vsel %vm1655, %v1652, %v1654
      %1658 = vst.msk [vmem:[#allocation4 + $0x90] sm:$0xff] %vm1535, %v1656
      %1659 = vrot.lane.b32.xlu0 %v1528, 36
      %v1660 = vpop.permute.xlu0 %1659
      %1661 = vrot.lane.b32.xlu0 %v1529, 36
      %v1662 = vpop.permute.xlu0 %1661
      %vm1663 = vcmask 293888
      %v1664 = vsel %vm1663, %v1660, %v1662
      %1666 = vst.msk [vmem:[#allocation4 + $0x98] sm:$0xff] %vm1535, %v1664
      %1667 = vrot.lane.b32.xlu0 %v1529, 59
      %v1668 = vpop.permute.xlu0 %1667
      %1669 = vrot.lane.b32.xlu0 %v1530, 59
      %v1670 = vpop.permute.xlu0 %1669
      %vm1671 = vcmask 482304
      %v1672 = vsel %vm1671, %v1668, %v1670
      %1674 = vst.msk [vmem:[#allocation4 + $0xa0] sm:$0xff] %vm1535, %v1672
      %1675 = vrot.lane.b32.xlu0 %v1527, 14
      %v1676 = vpop.permute.xlu0 %1675
      %1677 = vrot.lane.b32.xlu0 %v1528, 14
      %v1678 = vpop.permute.xlu0 %1677
      %vm1679 = vcmask 113664
      %v1680 = vsel %vm1679, %v1676, %v1678
      %1682 = vst.msk [vmem:[#allocation4 + $0xa8] sm:$0xff] %vm1535, %v1680
      %1683 = vrot.lane.b32.xlu0 %v1527, 118
      %v1684 = vpop.permute.xlu0 %1683
      %1686 = vst.msk [vmem:[#allocation4 + $0xb0] sm:$0xff] %vm1535, %v1684
      %1687 = vrot.lane.b32.xlu0 %v1527, 13
      %v1688 = vpop.permute.xlu0 %1687
      %1689 = vrot.lane.b32.xlu0 %v1528, 13
      %v1690 = vpop.permute.xlu0 %1689
      %vm1691 = vcmask 105472
      %v1692 = vsel %vm1691, %v1688, %v1690
      %1694 = vst.msk [vmem:[#allocation4 + $0xb8] sm:$0xff] %vm1535, %v1692
      %1695 = vrot.lane.b32.xlu0 %v1527, 117
      %v1696 = vpop.permute.xlu0 %1695
      %1698 = vst.msk [vmem:[#allocation4 + $0xc0] sm:$0xff] %vm1535, %v1696
      %1699 = vrot.lane.b32.xlu0 %v1527, 12
      %v1700 = vpop.permute.xlu0 %1699
      %1701 = vrot.lane.b32.xlu0 %v1528, 12
      %v1702 = vpop.permute.xlu0 %1701
      %vm1703 = vcmask 97280
      %v1704 = vsel %vm1703, %v1700, %v1702
      %1706 = vst.msk [vmem:[#allocation4 + $0xc8] sm:$0xff] %vm1535, %v1704
      %1707 = vrot.lane.b32.xlu0 %v1527, 116
      %v1708 = vpop.permute.xlu0 %1707
      %1710 = vst.msk [vmem:[#allocation4 + $0xd0] sm:$0xff] %vm1535, %v1708
      %1711 = vrot.lane.b32.xlu0 %v1527, 11
      %v1712 = vpop.permute.xlu0 %1711
      %1713 = vrot.lane.b32.xlu0 %v1528, 11
      %v1714 = vpop.permute.xlu0 %1713
      %vm1715 = vcmask 89088
      %v1716 = vsel %vm1715, %v1712, %v1714
      %1718 = vst.msk [vmem:[#allocation4 + $0xd8] sm:$0xff] %vm1535, %v1716
      %1719 = vrot.lane.b32.xlu0 %v1529, 52
      %v1720 = vpop.permute.xlu0 %1719
      %1721 = vrot.lane.b32.xlu0 %v1530, 52
      %v1722 = vpop.permute.xlu0 %1721
      %v1723 = vsel %vm553, %v1720, %v1722
      %1725 = vst.msk [vmem:[#allocation4 + $0xe0] sm:$0xff] %vm1535, %v1723
      %1726 = vrot.lane.b32.xlu0 %v1528, 28
      %v1727 = vpop.permute.xlu0 %1726
      %1728 = vrot.lane.b32.xlu0 %v1529, 28
      %v1729 = vpop.permute.xlu0 %1728
      %vm1730 = vcmask 228352
      %v1731 = vsel %vm1730, %v1727, %v1729
      %1733 = vst.msk [vmem:[#allocation4 + $0xe8] sm:$0xff] %vm1535, %v1731
      %1734 = vrot.lane.b32.xlu0 %v1529, 51
      %v1735 = vpop.permute.xlu0 %1734
      %1736 = vrot.lane.b32.xlu0 %v1530, 51
      %v1737 = vpop.permute.xlu0 %1736
      %vm1738 = vcmask 416768
      %v1739 = vsel %vm1738, %v1735, %v1737
      %1741 = vst.msk [vmem:[#allocation4 + $0xf0] sm:$0xff] %vm1535, %v1739
      %1742 = vrot.lane.b32.xlu0 %v1528, 27
      %v1743 = vpop.permute.xlu0 %1742
      %1744 = vrot.lane.b32.xlu0 %v1529, 27
      %v1745 = vpop.permute.xlu0 %1744
      %vm1746 = vcmask 220160
      %v1747 = vsel %vm1746, %v1743, %v1745
      %1749 = vst.msk [vmem:[#allocation4 + $0xf8] sm:$0xff] %vm1535, %v1747
      %1750 = vrot.lane.b32.xlu0 %v1529, 50
      %v1751 = vpop.permute.xlu0 %1750
      %1752 = vrot.lane.b32.xlu0 %v1530, 50
      %v1753 = vpop.permute.xlu0 %1752
      %vm1754 = vcmask 408576
      %v1755 = vsel %vm1754, %v1751, %v1753
      %1757 = vst.msk [vmem:[#allocation4 + $0x100] sm:$0xff] %vm1535, %v1755
      %1758 = vrot.lane.b32.xlu0 %v1528, 26
      %v1759 = vpop.permute.xlu0 %1758
      %1760 = vrot.lane.b32.xlu0 %v1529, 26
      %v1761 = vpop.permute.xlu0 %1760
      %vm1762 = vcmask 211968
      %v1763 = vsel %vm1762, %v1759, %v1761
      %1765 = vst.msk [vmem:[#allocation4 + $0x108] sm:$0xff] %vm1535, %v1763
      %1766 = vrot.lane.b32.xlu0 %v1529, 49
      %v1767 = vpop.permute.xlu0 %1766
      %1768 = vrot.lane.b32.xlu0 %v1530, 49
      %v1769 = vpop.permute.xlu0 %1768
      %vm1770 = vcmask 400384
      %v1771 = vsel %vm1770, %v1767, %v1769
      %1773 = vst.msk [vmem:[#allocation4 + $0x110] sm:$0xff] %vm1535, %v1771
      %1774 = vrot.lane.b32.xlu0 %v1527, 4
      %v1775 = vpop.permute.xlu0 %1774
      %1776 = vrot.lane.b32.xlu0 %v1528, 4
      %v1777 = vpop.permute.xlu0 %1776
      %vm1778 = vcmask 31744
      %v1779 = vsel %vm1778, %v1775, %v1777
      %1781 = vst.msk [vmem:[#allocation4 + $0x118] sm:$0xff] %vm1535, %v1779
      %1782 = vrot.lane.b32.xlu0 %v1527, 108
      %v1783 = vpop.permute.xlu0 %1782
      %1785 = vst.msk [vmem:[#allocation4 + $0x120] sm:$0xff] %vm1535, %v1783
      %1786 = vrot.lane.b32.xlu0 %v1527, 3
      %v1787 = vpop.permute.xlu0 %1786
      %1788 = vrot.lane.b32.xlu0 %v1528, 3
      %v1789 = vpop.permute.xlu0 %1788
      %vm1790 = vcmask 23552
      %v1791 = vsel %vm1790, %v1787, %v1789
      %1793 = vst.msk [vmem:[#allocation4 + $0x128] sm:$0xff] %vm1535, %v1791
      %1794 = vrot.lane.b32.xlu0 %v1527, 107
      %v1795 = vpop.permute.xlu0 %1794
      %1797 = vst.msk [vmem:[#allocation4 + $0x130] sm:$0xff] %vm1535, %v1795
      %1798 = vrot.lane.b32.xlu0 %v1527, 2
      %v1799 = vpop.permute.xlu0 %1798
      %1800 = vrot.lane.b32.xlu0 %v1528, 2
      %v1801 = vpop.permute.xlu0 %1800
      %vm1802 = vcmask 15360
      %v1803 = vsel %vm1802, %v1799, %v1801
      %1805 = vst.msk [vmem:[#allocation4 + $0x138] sm:$0xff] %vm1535, %v1803
      %1806 = vrot.lane.b32.xlu0 %v1527, 106
      %v1807 = vpop.permute.xlu0 %1806
      %1809 = vst.msk [vmem:[#allocation4 + $0x140] sm:$0xff] %vm1535, %v1807
      %1810 = vrot.lane.b32.xlu0 %v1527, 1
      %v1811 = vpop.permute.xlu0 %1810
      %1812 = vrot.lane.b32.xlu0 %v1528, 1
      %v1813 = vpop.permute.xlu0 %1812
      %vm1814 = vcmask 7168
      %v1815 = vsel %vm1814, %v1811, %v1813
      %1817 = vst.msk [vmem:[#allocation4 + $0x148] sm:$0xff] %vm1535, %v1815
      %1818 = vrot.lane.b32.xlu0 %v1529, 42
      %v1819 = vpop.permute.xlu0 %1818
      %1820 = vrot.lane.b32.xlu0 %v1530, 42
      %v1821 = vpop.permute.xlu0 %1820
      %vm1822 = vcmask 343040
      %v1823 = vsel %vm1822, %v1819, %v1821
      %1825 = vst.msk [vmem:[#allocation4 + $0x150] sm:$0xff] %vm1535, %v1823
      %1826 = vrot.lane.b32.xlu0 %v1528, 18
      %v1827 = vpop.permute.xlu0 %1826
      %1828 = vrot.lane.b32.xlu0 %v1529, 18
      %v1829 = vpop.permute.xlu0 %1828
      %vm1830 = vcmask 146432
      %v1831 = vsel %vm1830, %v1827, %v1829
      %1833 = vst.msk [vmem:[#allocation4 + $0x158] sm:$0xff] %vm1535, %v1831
      %1834 = vrot.lane.b32.xlu0 %v1529, 41
      %v1835 = vpop.permute.xlu0 %1834
      %1836 = vrot.lane.b32.xlu0 %v1530, 41
      %v1837 = vpop.permute.xlu0 %1836
      %vm1838 = vcmask 334848
      %v1839 = vsel %vm1838, %v1835, %v1837
      %1841 = vst.msk [vmem:[#allocation4 + $0x160] sm:$0xff] %vm1535, %v1839
      %1842 = vrot.lane.b32.xlu0 %v1528, 17
      %v1843 = vpop.permute.xlu0 %1842
      %1844 = vrot.lane.b32.xlu0 %v1529, 17
      %v1845 = vpop.permute.xlu0 %1844
      %vm1846 = vcmask 138240
      %v1847 = vsel %vm1846, %v1843, %v1845
      %1849 = vst.msk [vmem:[#allocation4 + $0x168] sm:$0xff] %vm1535, %v1847
      %1850 = vrot.lane.b32.xlu0 %v1529, 40
      %v1851 = vpop.permute.xlu0 %1850
      %1852 = vrot.lane.b32.xlu0 %v1530, 40
      %v1853 = vpop.permute.xlu0 %1852
      %vm1854 = vcmask 326656
      %v1855 = vsel %vm1854, %v1851, %v1853
      %1857 = vst.msk [vmem:[#allocation4 + $0x170] sm:$0xff] %vm1535, %v1855
      %1858 = vrot.lane.b32.xlu0 %v1528, 16
      %v1859 = vpop.permute.xlu0 %1858
      %1860 = vrot.lane.b32.xlu0 %v1529, 16
      %v1861 = vpop.permute.xlu0 %1860
      %vm1862 = vcmask 130048
      %v1863 = vsel %vm1862, %v1859, %v1861
      %1865 = vst.msk [vmem:[#allocation4 + $0x178] sm:$0xff] %vm1535, %v1863
      %1866 = vrot.lane.b32.xlu0 %v1529, 39
      %v1867 = vpop.permute.xlu0 %1866
      %1868 = vrot.lane.b32.xlu0 %v1530, 39
      %v1869 = vpop.permute.xlu0 %1868
      %vm1870 = vcmask 318464
      %v1871 = vsel %vm1870, %v1867, %v1869
      %1873 = vst.msk [vmem:[#allocation4 + $0x180] sm:$0xff] %vm1535, %v1871
      %v1874 = vld [vmem:[%s7] sm:$0xff]
      %v1875 = vld [vmem:[%s7 + $0x8] sm:$0xff]
      %v1876 = vld [vmem:[%s7 + $0x10] sm:$0xff]
      %v1877 = vld [vmem:[%s7 + $0x18] sm:$0xf]
      %v1878 = vld [vmem:[%s7 + $0x1c] sm:$0x33]
      %v1879 = vld [vmem:[%s7 + $0x24] sm:$0x33]
      %v1880 = vld [vmem:[%s7 + $0x2c] sm:$0x33]
      %v1881 = vld [vmem:[%s7 + $0x34] sm:$0x3]
      %v1882 = vld [vmem:[#allocation4] sm:$0xff]
      %v1883 = vld [vmem:[#allocation4 + $0x8] sm:$0xff]
      %v1884 = vld [vmem:[#allocation4 + $0x10] sm:$0xff]
      %v1885 = vld [vmem:[#allocation4 + $0x18] sm:$0xff]
      %v1886 = vld [vmem:[#allocation4 + $0x20] sm:$0xff]
      %v1887 = vld [vmem:[#allocation4 + $0x28] sm:$0xff]
      %v1888 = vld [vmem:[#allocation4 + $0x30] sm:$0xff]
      %v1889 = vld [vmem:[#allocation4 + $0x38] sm:$0xff]
      %v1890 = vld [vmem:[#allocation4 + $0x40] sm:$0xff]
      %v1891 = vld [vmem:[#allocation4 + $0x48] sm:$0xff]
      %v1892 = vld [vmem:[#allocation4 + $0x50] sm:$0xff]
      %v1893 = vld [vmem:[#allocation4 + $0x58] sm:$0xff]
      %v1894 = vld [vmem:[#allocation4 + $0x60] sm:$0xff]
      %v1895 = vld [vmem:[#allocation4 + $0x68] sm:$0xff]
      %v1896 = vld [vmem:[#allocation4 + $0x70] sm:$0xff]
      %v1897 = vld [vmem:[#allocation4 + $0x78] sm:$0xff]
      %v1898 = vld [vmem:[#allocation4 + $0x80] sm:$0xff]
      %v1899 = vld [vmem:[#allocation4 + $0x88] sm:$0xff]
      %v1900 = vld [vmem:[#allocation4 + $0x90] sm:$0xff]
      %v1901 = vld [vmem:[#allocation4 + $0x98] sm:$0xff]
      %v1902 = vld [vmem:[#allocation4 + $0xa0] sm:$0xff]
      %v1903 = vld [vmem:[#allocation4 + $0xa8] sm:$0xff]
      %v1904 = vld [vmem:[#allocation4 + $0xb0] sm:$0xff]
      %v1905 = vld [vmem:[#allocation4 + $0xb8] sm:$0xff]
      %v1906 = vld [vmem:[#allocation4 + $0xc0] sm:$0xff]
      %v1907 = vld [vmem:[#allocation4 + $0xc8] sm:$0xff]
      %v1908 = vld [vmem:[#allocation4 + $0xd0] sm:$0xff]
      %v1909 = vld [vmem:[#allocation4 + $0xd8] sm:$0xff]
      %v1910 = vld [vmem:[#allocation4 + $0xe0] sm:$0xff]
      %v1911 = vld [vmem:[#allocation4 + $0xe8] sm:$0xff]
      %v1912 = vld [vmem:[#allocation4 + $0xf0] sm:$0xff]
      %v1913 = vld [vmem:[#allocation4 + $0xf8] sm:$0xff]
      %v1914 = vld [vmem:[#allocation4 + $0x100] sm:$0xff]
      %v1915 = vld [vmem:[#allocation4 + $0x108] sm:$0xff]
      %v1916 = vld [vmem:[#allocation4 + $0x110] sm:$0xff]
      %v1917 = vld [vmem:[#allocation4 + $0x118] sm:$0xff]
      %v1918 = vld [vmem:[#allocation4 + $0x120] sm:$0xff]
      %v1919 = vld [vmem:[#allocation4 + $0x128] sm:$0xff]
      %v1920 = vld [vmem:[#allocation4 + $0x130] sm:$0xff]
      %v1921 = vld [vmem:[#allocation4 + $0x138] sm:$0xff]
      %v1922 = vld [vmem:[#allocation4 + $0x140] sm:$0xff]
      %v1923 = vld [vmem:[#allocation4 + $0x148] sm:$0xff]
      %v1924 = vld [vmem:[#allocation4 + $0x150] sm:$0xff]
      %v1925 = vld [vmem:[#allocation4 + $0x158] sm:$0xff]
      %v1926 = vld [vmem:[#allocation4 + $0x160] sm:$0xff]
      %v1927 = vld [vmem:[#allocation4 + $0x168] sm:$0xff]
      %v1928 = vld [vmem:[#allocation4 + $0x170] sm:$0xff]
      %v1929 = vld [vmem:[#allocation4 + $0x178] sm:$0xff]
      %v1930 = vld [vmem:[#allocation4 + $0x180] sm:$0xff]
      %v1931 = vld [vmem:[%s8] sm:$0xff]
      %v1932 = vld [vmem:[%s8 + $0x8] sm:$0xf]
      %1934 = vset.pattern.permute.xlu0 0
      %1935 = vperm.xlu0 %1934, %v1931
      %v1936 = vpop.permute.xlu0 %1935
      %1939 = vset.pattern.permute.xlu0 0
      %1940 = vperm.xlu0 %1939, %v1932
      %v1941 = vpop.permute.xlu0 %1940
      %v1951 = vunpack.c.l.b16 %v1874
      %v1952 = vunpack.c.h.b16 %v1874
      %v1953 = vunpack.c.l.b16 %v1875
      %v1954 = vunpack.c.h.b16 %v1875
      %v1955 = vunpack.c.l.b16 %v1876
      %v1956 = vunpack.c.h.b16 %v1876
      %v1957 = vunpack.c.l.b16 %v1877
      %v1958 = vunpack.c.l.b16 %v1878
      %v1959 = vunpack.c.h.b16 %v1878
      %v1960 = vunpack.c.l.b16 %v1879
      %v1961 = vunpack.c.h.b16 %v1879
      %v1962 = vunpack.c.l.b16 %v1880
      %v1963 = vunpack.c.h.b16 %v1880
      %v1964 = vunpack.c.l.b16 %v1881
      %v1965 = vpack.c.b16 %v1958, %v1951
      %v1966 = vpack.c.b16 %v1959, %v1952
      %v1967 = vpack.c.b16 %v1960, %v1953
      %v1968 = vpack.c.b16 %v1961, %v1954
      %v1969 = vpack.c.b16 %v1962, %v1955
      %v1970 = vpack.c.b16 %v1963, %v1956
      %v1971 = vpack.c.b16 %v1964, %v1957
      %vm1978 = vcmask 130048
      %v1980 = vsel %vm1978, %v1971, 0
      %1982 = vmatprep.subr.bf16.mxu0 0
      %1983 = vmatpush1.bf16.msra.mxu0 %v1882
      %1984 = vmatprep.subr.bf16.mxu0 0
      %1985 = vmatpush1.bf16.msra.mxu0 %v1883
      %1986 = vmatprep.subr.bf16.mxu0 0
      %1987 = vmatpush1.bf16.msra.mxu0 %v1884
      %1988 = vmatprep.subr.bf16.mxu0 0
      %1989 = vmatpush1.bf16.msra.mxu0 %v1885
      %1990 = vmatprep.subr.bf16.mxu0 0
      %1991 = vmatpush1.bf16.msra.mxu0 %v1886
      %1992 = vmatprep.subr.bf16.mxu0 0
      %1993 = vmatpush1.bf16.msra.mxu0 %v1887
      %1994 = vmatprep.subr.bf16.mxu0 0
      %1995 = vmatpush1.bf16.msra.mxu0 %v1888
      %1996 = vmatprep.subr.bf16.mxu0 0
      %1997 = vmatpush1.bf16.msra.mxu0 %v1889
      %1998 = vmatprep.subr.bf16.mxu0 0
      %1999 = vmatpush1.bf16.msra.mxu0 %v1890
      %2000 = vmatprep.subr.bf16.mxu0 0
      %2001 = vmatpush1.bf16.msra.mxu0 %v1891
      %2002 = vmatprep.subr.bf16.mxu0 0
      %2003 = vmatpush1.bf16.msra.mxu0 %v1892
      %2004 = vmatprep.subr.bf16.mxu0 0
      %2005 = vmatpush1.bf16.msra.mxu0 %v1893
      %2006 = vmatprep.subr.bf16.mxu0 0
      %2007 = vmatpush1.bf16.msra.mxu0 %v1894
      %2008 = vmatprep.subr.bf16.mxu0 0
      %2009 = vmatpush1.bf16.msra.mxu0 %v1895
      %2010 = vmatprep.subr.bf16.mxu0 0
      %2011 = vmatpush1.bf16.msra.mxu0 %v1896
      %2012 = vmatprep.subr.bf16.mxu0 0
      %2013 = vmatpush1.bf16.msra.mxu0 %v1897
      %2014 = vmatprep.mubr.bf16.mxu0 %v1966
      %2015 = vmatmul.mubr.bf16.gmra.mrb[0].mxu0 %v1965
      %v2016 = vpop.f32.mrb[0].mxu0
      %v2017 = vadd.f32 %v1936, %v2016
      %v2018 = vpop.f32.mrb[0].mxu0
      %v2019 = vpop.f32.mrb[0].mxu0
      %v2020 = vadd.f32 %v1941, %v2019
      %v2021 = vpop.f32.mrb[0].mxu0
      %2022 = vdwg.mxu0
      %2023 = vmatprep.subr.bf16.mxu0 0
      %2024 = vmatpush1.bf16.msra.mxu0 %v1898
      %2025 = vmatprep.subr.bf16.mxu0 0
      %2026 = vmatpush1.bf16.msra.mxu0 %v1899
      %2027 = vmatprep.subr.bf16.mxu0 0
      %2028 = vmatpush1.bf16.msra.mxu0 %v1900
      %2029 = vmatprep.subr.bf16.mxu0 0
      %2030 = vmatpush1.bf16.msra.mxu0 %v1901
      %2031 = vmatprep.subr.bf16.mxu0 0
      %2032 = vmatpush1.bf16.msra.mxu0 %v1902
      %2033 = vmatprep.subr.bf16.mxu0 0
      %2034 = vmatpush1.bf16.msra.mxu0 %v1903
      %2035 = vmatprep.subr.bf16.mxu0 0
      %2036 = vmatpush1.bf16.msra.mxu0 %v1904
      %2037 = vmatprep.subr.bf16.mxu0 0
      %2038 = vmatpush1.bf16.msra.mxu0 %v1905
      %2039 = vmatprep.subr.bf16.mxu0 0
      %2040 = vmatpush1.bf16.msra.mxu0 %v1906
      %2041 = vmatprep.subr.bf16.mxu0 0
      %2042 = vmatpush1.bf16.msra.mxu0 %v1907
      %2043 = vmatprep.subr.bf16.mxu0 0
      %2044 = vmatpush1.bf16.msra.mxu0 %v1908
      %2045 = vmatprep.subr.bf16.mxu0 0
      %2046 = vmatpush1.bf16.msra.mxu0 %v1909
      %2047 = vmatprep.subr.bf16.mxu0 0
      %2048 = vmatpush1.bf16.msra.mxu0 %v1910
      %2049 = vmatprep.subr.bf16.mxu0 0
      %2050 = vmatpush1.bf16.msra.mxu0 %v1911
      %2051 = vmatprep.subr.bf16.mxu0 0
      %2052 = vmatpush1.bf16.msra.mxu0 %v1912
      %2053 = vmatprep.subr.bf16.mxu0 0
      %2054 = vmatpush1.bf16.msra.mxu0 %v1913
      %2055 = vmatprep.mubr.bf16.mxu0 %v1968
      %2056 = vmatmul.mubr.bf16.gmra.mrb[0].mxu0 %v1967
      %v2057 = vpop.f32.mrb[0].mxu0
      %v2058 = vadd.f32 %v2017, %v2057
      %v2059 = vpop.f32.mrb[0].mxu0
      %v2060 = vpop.f32.mrb[0].mxu0
      %v2061 = vadd.f32 %v2020, %v2060
      %v2062 = vpop.f32.mrb[0].mxu0
      %2063 = vdwg.mxu0
      %2064 = vmatprep.subr.bf16.mxu0 0
      %2065 = vmatpush1.bf16.msra.mxu0 %v1914
      %2066 = vmatprep.subr.bf16.mxu0 0
      %2067 = vmatpush1.bf16.msra.mxu0 %v1915
      %2068 = vmatprep.subr.bf16.mxu0 0
      %2069 = vmatpush1.bf16.msra.mxu0 %v1916
      %2070 = vmatprep.subr.bf16.mxu0 0
      %2071 = vmatpush1.bf16.msra.mxu0 %v1917
      %2072 = vmatprep.subr.bf16.mxu0 0
      %2073 = vmatpush1.bf16.msra.mxu0 %v1918
      %2074 = vmatprep.subr.bf16.mxu0 0
      %2075 = vmatpush1.bf16.msra.mxu0 %v1919
      %2076 = vmatprep.subr.bf16.mxu0 0
      %2077 = vmatpush1.bf16.msra.mxu0 %v1920
      %2078 = vmatprep.subr.bf16.mxu0 0
      %2079 = vmatpush1.bf16.msra.mxu0 %v1921
      %2080 = vmatprep.subr.bf16.mxu0 0
      %2081 = vmatpush1.bf16.msra.mxu0 %v1922
      %2082 = vmatprep.subr.bf16.mxu0 0
      %2083 = vmatpush1.bf16.msra.mxu0 %v1923
      %2084 = vmatprep.subr.bf16.mxu0 0
      %2085 = vmatpush1.bf16.msra.mxu0 %v1924
      %2086 = vmatprep.subr.bf16.mxu0 0
      %2087 = vmatpush1.bf16.msra.mxu0 %v1925
      %2088 = vmatprep.subr.bf16.mxu0 0
      %2089 = vmatpush1.bf16.msra.mxu0 %v1926
      %2090 = vmatprep.subr.bf16.mxu0 0
      %2091 = vmatpush1.bf16.msra.mxu0 %v1927
      %2092 = vmatprep.subr.bf16.mxu0 0
      %2093 = vmatpush1.bf16.msra.mxu0 %v1928
      %2094 = vmatprep.subr.bf16.mxu0 0
      %2095 = vmatpush1.bf16.msra.mxu0 %v1929
      %2096 = vmatprep.mubr.bf16.mxu0 %v1970
      %2097 = vmatmul.mubr.bf16.gmra.mrb[0].mxu0 %v1969
      %v2098 = vpop.f32.mrb[0].mxu0
      %v2099 = vadd.f32 %v2058, %v2098
      %v2100 = vpop.f32.mrb[0].mxu0
      %v2101 = vpop.f32.mrb[0].mxu0
      %v2102 = vadd.f32 %v2061, %v2101
      %v2103 = vpop.f32.mrb[0].mxu0
      %2104 = vdwg.mxu0
      %2105 = vmatprep.subr.bf16.mxu0 0
      %2106 = vmatpush1.bf16.msra.mxu0 %v1930
      %2107 = vmatprep.subr.bf16.mxu0 0
      %2108 = vmatpush1.bf16.msra.mxu0 0
      %2109 = vmatprep.subr.bf16.mxu0 0
      %2110 = vmatpush1.bf16.msra.mxu0 0
      %2111 = vmatprep.subr.bf16.mxu0 0
      %2112 = vmatpush1.bf16.msra.mxu0 0
      %2113 = vmatprep.subr.bf16.mxu0 0
      %2114 = vmatpush1.bf16.msra.mxu0 0
      %2115 = vmatprep.subr.bf16.mxu0 0
      %2116 = vmatpush1.bf16.msra.mxu0 0
      %2117 = vmatprep.subr.bf16.mxu0 0
      %2118 = vmatpush1.bf16.msra.mxu0 0
      %2119 = vmatprep.subr.bf16.mxu0 0
      %2120 = vmatpush1.bf16.msra.mxu0 0
      %2121 = vmatprep.subr.bf16.mxu0 0
      %2122 = vmatpush1.bf16.msra.mxu0 0
      %2123 = vmatprep.subr.bf16.mxu0 0
      %2124 = vmatpush1.bf16.msra.mxu0 0
      %2125 = vmatprep.subr.bf16.mxu0 0
      %2126 = vmatpush1.bf16.msra.mxu0 0
      %2127 = vmatprep.subr.bf16.mxu0 0
      %2128 = vmatpush1.bf16.msra.mxu0 0
      %2129 = vmatprep.subr.bf16.mxu0 0
      %2130 = vmatpush1.bf16.msra.mxu0 0
      %2131 = vmatprep.subr.bf16.mxu0 0
      %2132 = vmatpush1.bf16.msra.mxu0 0
      %2133 = vmatprep.subr.bf16.mxu0 0
      %2134 = vmatpush1.bf16.msra.mxu0 0
      %2135 = vmatprep.subr.bf16.mxu0 0
      %2136 = vmatpush1.bf16.msra.mxu0 0
      %2137 = vmatprep.mubr.bf16.mxu0 0
      %2138 = vmatmul.mubr.bf16.gmra.mrb[0].mxu0 %v1980
      %v2139 = vpop.f32.mrb[0].mxu0
      %v2140 = vadd.f32 %v2099, %v2139
      %v2141 = vpop.f32.mrb[0].mxu0
      %v2142 = vpop.f32.mrb[0].mxu0
      %v2143 = vadd.f32 %v2102, %v2142
      %v2144 = vpop.f32.mrb[0].mxu0
      %2145 = vdwg.mxu0
      %v2146 = vsub.f32 0.0, %v2140
      %v2147 = vsub.f32 0.0, %v2143
      %v2148 = vmul.f32 %v2146, 1.442695
      %v2149 = vpow.pop %v2148
      %v2150 = vmul.f32 %v2147, 1.442695
      %v2151 = vpow.pop %v2150
      %v2152 = vadd.f32 %v2149, 1.0
      %v2153 = vadd.f32 %v2151, 1.0
      %v2154 = vrcp.pop %v2152
      %v2155 = vmul.f32 %v2140, %v2154
      %v2156 = vrcp.pop %v2153
      %v2157 = vmul.f32 %v2143, %v2156
      %2158 = vst.msk [vmem:[%s332] sm:$0xff] %vm1535, %v2155
      %vm2159 = vcmask 568320
      %2160 = vst.msk [vmem:[%s332 + $0x8] sm:$0xf] %vm2159, %v2157
      %p2161 = scmp.lt.s32.totalorder %s20, 1
      %s2162 = scalar_select %p2161, %s20, 1
      %s2163 = smul.addr %s2162, 2
      %s2164 = smul.addr %s2163, 8
      %s2165 = scalar_lea.vmem %s9, %s2164
      // Predicated region
      $region57: #{model_forward.1} parent=55 // pred_check
        %p2166 = pneg %p232
      $region58: #{model_forward.1} parent=55 // pred_check_branch
        %2168 = sbr.rel (%p2166) target = $region60
      $region59: #{model_forward.1} parent=55 // pred_region
        _
      $region60: #{model_forward.1} parent=55 // pred_fallthru
        _
    $region56: #{model_forward.1} parent=5 // pred_fallthru
      _
    %p2169 = scmp.le.s32.totalorder 2, %s15
    // Predicated region
    $region61: #{model_forward.1} parent=5 // pred_check
      %p2170 = pneg %p2169
    $region62: #{model_forward.1} parent=5 // pred_check_branch
      %2172 = sbr.rel (%p2170) target = $region64
    $region63: #{model_forward.1} parent=5 // pred_region
      %s2173 = ssub.s32 %s15, 2
      // Predicated region
      $region65: #{model_forward.1} parent=63 // pred_check
        %p2174 = pneg %p238
      $region66: #{model_forward.1} parent=63 // pred_check_branch
        %2176 = sbr.rel (%p2174) target = $region68
      $region67: #{model_forward.1} parent=63 // pred_region
        %p2177 = scmp.lt.s32.totalorder %s21, 1
        %s2178 = scalar_select %p2177, %s21, 1
        %s2179 = smul.addr %s2178, 2
        %s2180 = smul.addr %s2179, 8
        %s2181 = scalar_lea.vmem %s9, %s2180
      $region68: #{model_forward.1} parent=63 // pred_fallthru
        _
    $region64: #{model_forward.1} parent=5 // pred_fallthru
      _
  $region6: #{model_forward.1} parent=0 // loop_footer
    %s19 = sadd.s32 1, %s15
  $region7: #{model_forward.1} parent=0 // loop_footer_branch
    %14 = sbr.rel target = $region3
  $region8: #{model_forward.1} parent=0 // loop_exit
    _

</llo_original>
